<compile_context>
chip_gen: v5e
topology: v5e:2x2
jax: 0.10.0
libtpu: 0.0.40
codegen_flags: <defaults>
</compile_context>

<pallas_src>
import functools

import jax
import jax.numpy as jnp
from jax.experimental import pallas as pl
from jax.experimental.pallas import tpu as pltpu


# ----------------------------------------------------------------------------
# Fused kernel:  g = x @ W  ->  max_k g[idx] - g  ->  *scale + shift
# Grid: (batch, row_tile).  g for the whole batch is computed once per batch
# (row_tile == 0) into a VMEM scratch; every row tile then gathers from it.
# ----------------------------------------------------------------------------
def _local_agg_kernel(idx_hbm, x_ref, w_ref, scale_ref, shift_ref, o_ref,
                      g_scr, idx_smem, idx_sem, *, tm, K, nt):
    b = pl.program_id(0)          # batch index     ("parallel")
    n = pl.program_id(1)          # row-tile index  ("arbitrary": depends on n==0 init)
    slot = n & 1                  # which SMEM id buffer belongs to this tile

    def idx_copy(tile, buf):
        # (tm*K,) contiguous int32 neighbour ids of one row tile: HBM -> SMEM.
        return pltpu.make_async_copy(idx_hbm.at[b, tile], idx_smem.at[buf],
                                     idx_sem.at[buf])

    # (1) Once per batch: kick off the DMA for tile 0's ids, then project the whole
    #     batch on the MXU (bf16 x bf16 -> f32 accumulate).  The matmul hides the DMA.
    @pl.when(n == 0)
    def _():
        idx_copy(0, 0).start()
        g_scr[...] = jnp.dot(x_ref[...], w_ref[...],
                             preferred_element_type=jnp.float32)     # [N, C_out] f32
    # TODO(synk): at real DeLA widths (C >= 128) spread this whole-batch matmul across
    #             the row tiles (two-phase grid) to remove the per-batch pipeline bubble.

    # (2) Prefetch the NEXT tile's neighbour ids into the other SMEM buffer.
    @pl.when(n + 1 < nt)
    def _():
        idx_copy(n + 1, (n + 1) & 1).start()

    idx_copy(n, slot).wait()      # this tile's ids are now resident in idx_smem[slot]

    row0 = pl.multiple_of(n * tm, tm)        # first global row of this output tile
    scale = scale_ref[...]                   # [1, C_out]  (hoisted out of the loop)
    shift = shift_ref[...]

    # (3) Edge max-pool + folded eval-BatchNorm, 8 output rows per loop iteration:
    #       * 8*K independent dynamic row loads from the VMEM-resident g,
    #       * pairwise max tree per row (depth 3 for K=8) instead of a serial chain,
    #       * one fused (pooled - center)*scale + shift store of a full [8, C_out] slab.
    #     (scale kept as an epilogue multiply: folding into W is invalid if gamma < 0.)
    def group_body(gi, carry):
        r0 = pl.multiple_of(gi * 8, 8)       # row offset inside the tile
        base = r0 * K                        # offset inside the tile's id vector
        rows = []
        for r in range(8):
            neigh = [g_scr[pl.ds(idx_smem[slot, base + r * K + k], 1), :]
                     for k in range(K)]
            while len(neigh) > 1:            # pairwise max tree
                nxt = [jnp.maximum(neigh[2 * i], neigh[2 * i + 1])
                       for i in range(len(neigh) // 2)]
                if len(neigh) % 2:
                    nxt.append(neigh[-1])
                neigh = nxt
            rows.append(neigh[0])            # [1, C_out]
        pooled = jnp.concatenate(rows, axis=0)                            # [8, C_out]
        center = g_scr[pl.ds(pl.multiple_of(row0 + r0, 8), 8), :]         # [8, C_out]
        y = (pooled - center) * scale + shift
        o_ref[pl.ds(r0, 8), :] = y.astype(o_ref.dtype)
        return carry

    jax.lax.fori_loop(0, tm // 8, group_body, 0)


def _pick_row_tile(n, max_tile=128):
    """Largest multiple of 8 that divides n and is <= max_tile (fallback: full n)."""
    tm = min(max_tile, n)
    tm -= tm % 8
    while tm >= 8 and n % tm != 0:
        tm -= 8
    return tm if tm >= 8 and n % tm == 0 else n


def local_aggregation(f, group_idx, w, scale, shift, *, block_rows=128):
    """out[b,n,:] = (max_k g[b, idx[b,n,k], :] - g[b,n,:]) * scale + shift, g = f @ w."""
    B, N, C_in = f.shape
    C_out = w.shape[1]
    K = group_idx.shape[-1]
    assert N % 8 == 0, "point count must be a multiple of 8 (vreg sublane tiling)"
    tm = _pick_row_tile(N, block_rows)
    nt = N // tm

    # One-time wrapper-side prep (hoisted out of the kernel per the perf review):
    #  * clamp neighbour ids here (guards padded / OOB ids; semantic choice vs. PyTorch
    #    which would index with the raw value),
    #  * reshape ids so every tile's ids form one contiguous (tm*K,) chunk for the DMA,
    #  * cast activations / weights to bf16 for the MXU.
    idx_tiles = jnp.clip(group_idx, 0, N - 1).astype(jnp.int32).reshape(B, nt, tm * K)
    x_bf16 = f.astype(jnp.bfloat16)
    w_bf16 = w.astype(jnp.bfloat16)
    scale2d = scale.reshape(1, C_out).astype(jnp.float32)
    shift2d = shift.reshape(1, C_out).astype(jnp.float32)

    out_itemsize = jnp.dtype(f.dtype).itemsize
    vmem_bytes = (N * C_out * 4                      # g_scr (whole-batch projected g)
                  + 2 * N * C_in * 2                 # double-buffered bf16 x block
                  + 2 * tm * C_out * out_itemsize    # double-buffered output block
                  + 2 * C_in * C_out * 2             # weights
                  + 4 * C_out * 4)                   # scale + shift
    vmem_limit = int(min(128 * 1024 * 1024, max(2 * vmem_bytes, 16 * 1024 * 1024)))
    # TODO(synk): on v7x (64 MiB VMEM) switch g_scr to a two-level N tiling once
    #             N*C_out*4 + 2*N*C_in*2 no longer fits the budget above.

    kernel = functools.partial(_local_agg_kernel, tm=tm, K=K, nt=nt)
    grid_spec = pltpu.PrefetchScalarGridSpec(
        num_scalar_prefetch=0,
        grid=(B, nt),
        in_specs=[
            pl.BlockSpec(memory_space=pl.ANY),                       # ids stay in HBM
            pl.BlockSpec((None, N, C_in), lambda b, n: (b, 0, 0)),   # per-batch x, resident
            pl.BlockSpec((C_in, C_out), lambda b, n: (0, 0)),
            pl.BlockSpec((1, C_out), lambda b, n: (0, 0)),
            pl.BlockSpec((1, C_out), lambda b, n: (0, 0)),
        ],
        out_specs=pl.BlockSpec((None, tm, C_out), lambda b, n: (b, n, 0)),
        scratch_shapes=[
            pltpu.VMEM((N, C_out), jnp.float32),     # whole-batch projected features g
            pltpu.SMEM((2, tm * K), jnp.int32),      # double-buffered per-tile ids
            pltpu.SemaphoreType.DMA((2,)),           # one DMA semaphore per id buffer
        ],
    )
    out = pl.pallas_call(
        kernel,
        out_shape=jax.ShapeDtypeStruct((B, N, C_out), f.dtype),
        grid_spec=grid_spec,
        compiler_params=pltpu.CompilerParams(
            # batch axis may be split across TensorCores; the row-tile axis must stay
            # sequential per core because tiles n>0 consume the g computed at n==0.
            dimension_semantics=("parallel", "arbitrary"),
            vmem_limit_bytes=vmem_limit),
    )(idx_tiles, x_bf16, w_bf16, scale2d, shift2d)
    # TODO(synk): for B == 1 on v7x, split the row-tile axis across the two TensorCores
    #             (core_map / VMEM_SHARED g) so the second core is not idle.
    # TODO(synk): if production C_out stays < 128, repack the output into a lane-dense
    #             slab (last dim a multiple of 128) to avoid masked vst.msk stores.
    return out


# ----------------------------------------------------------------------------
# Pure-JAX reference (same bf16 matmul path) for verification.
# ----------------------------------------------------------------------------
def local_aggregation_reference(f, group_idx, w, scale, shift):
    g = jnp.einsum("bnc,cd->bnd", f.astype(jnp.bfloat16), w.astype(jnp.bfloat16),
                   preferred_element_type=jnp.float32)                 # [B, N, C]
    nbr = jax.vmap(lambda gb, ib: gb[ib])(g, group_idx)                # [B, N, K, C]
    pooled = nbr.max(axis=2) - g
    return pooled * scale[None, None, :] + shift[None, None, :]


if __name__ == "__main__":
    # LocalAggregation(in_channels=32, out_channels=32, bn_momentum=0.1) — eval mode.
    B, N, K, C = 2, 256, 8, 32

    root = jax.random.PRNGKey(0)
    kf, ki, kw, kg, kb, km, kv = jax.random.split(root, 7)

    f = jax.random.normal(kf, (B, N, C), jnp.float32)
    group_idx = jax.random.randint(ki, (B, N, K), 0, N, jnp.int32)
    w = 0.1 * jax.random.normal(kw, (C, C), jnp.float32)

    # Eval-mode BatchNorm1d folded to per-channel scale/shift.
    # NOTE: the module inits gamma = init_weight = 0.0 (LayerScale-style); we use small
    # non-zero gammas and non-trivial running stats so the output is meaningful to check.
    eps = 1e-5
    gamma = 0.2 + 0.05 * jax.random.normal(kg, (C,), jnp.float32)
    beta = 0.05 * jax.random.normal(kb, (C,), jnp.float32)
    running_mean = 0.1 * jax.random.normal(km, (C,), jnp.float32)
    running_var = 1.0 + 0.1 * jax.random.uniform(kv, (C,), jnp.float32)
    scale = gamma / jnp.sqrt(running_var + eps)
    shift = beta - running_mean * scale

    out = local_aggregation(f, group_idx, w, scale, shift, block_rows=128)
    out = jax.block_until_ready(out)

    ref = local_aggregation_reference(f, group_idx, w, scale, shift)
    assert out.shape == (B, N, C) and out.dtype == jnp.float32
    assert bool(jnp.all(jnp.isfinite(out)))
    max_err = float(jnp.max(jnp.abs(out - ref)))
    assert bool(jnp.allclose(out, ref, atol=1e-3, rtol=1e-3)), max_err
    print("KERNEL_OK")
</pallas_src>

<mosaic_0001>
module attributes {stable_mosaic.version = 11 : i64} {
  func.func @_local_agg_kernel(%arg0: i32, %arg1: i32, %arg2: memref<2x2x1024xi32, #tpu.memory_space<any>>, %arg3: memref<1x256x32xbf16, #tpu.memory_space<vmem>>, %arg4: memref<32x32xbf16, #tpu.memory_space<vmem>>, %arg5: memref<1x32xf32, #tpu.memory_space<vmem>>, %arg6: memref<1x32xf32, #tpu.memory_space<vmem>>, %arg7: memref<1x128x32xf32, #tpu.memory_space<vmem>>, %arg8: memref<256x32xf32, #tpu.memory_space<vmem>>, %arg9: memref<2x1024xi32, #tpu.memory_space<smem>>, %arg10: memref<2x!tpu.dma_semaphore, #tpu.memory_space<semaphore_mem>>) attributes {dimension_semantics = [#tpu.dimension_semantics<parallel>, #tpu.dimension_semantics<arbitrary>], iteration_bounds = array<i64: 2, 2>, scalar_prefetch = 0 : i64, scratch_operands = 3 : i64, tpu.core_type = #tpu.core_type<tc>, window_params = [{}, {transform_indices = @transform_1, window_bounds = array<i64: 1, 256, 32>}, {pipeline_mode = #tpu.pipeline_mode<synchronous>, transform_indices = @transform_2, window_bounds = array<i64: 32, 32>}, {pipeline_mode = #tpu.pipeline_mode<synchronous>, transform_indices = @transform_3, window_bounds = array<i64: 1, 32>}, {pipeline_mode = #tpu.pipeline_mode<synchronous>, transform_indices = @transform_4, window_bounds = array<i64: 1, 32>}, {transform_indices = @transform_5, window_bounds = array<i64: 1, 128, 32>}]} {
    %c1_i32 = arith.constant 1 : i32
    %0 = arith.andi %arg1, %c1_i32 : i32
    %c0_i32 = arith.constant 0 : i32
    %1 = arith.cmpi eq, %arg1, %c0_i32 : i32
    %2 = arith.extui %1 : i1 to i32
    %c0_i32_0 = arith.constant 0 : i32
    %3 = arith.cmpi ne, %2, %c0_i32_0 : i32
    scf.if %3 {
      %c0_i32_11 = arith.constant 0 : i32
      %c0_i32_12 = arith.constant 0 : i32
      %c0_i32_13 = arith.constant 0 : i32
      %c0_i32_14 = arith.constant 0 : i32
      %19 = tpu.memref_slice %arg2[%arg0, %c0_i32_11, %c0_i32_14] : memref<2x2x1024xi32, #tpu.memory_space<any>> -> memref<1x1x1024xi32, #tpu.memory_space<any>>
      %20 = tpu.memref_squeeze %19 : memref<1x1x1024xi32, #tpu.memory_space<any>> -> memref<1024xi32, #tpu.memory_space<any>>
      %c0_i32_15 = arith.constant 0 : i32
      %21 = tpu.memref_slice %arg9[%c0_i32_12, %c0_i32_15] : memref<2x1024xi32, #tpu.memory_space<smem>> -> memref<1x1024xi32, #tpu.memory_space<smem>>
      %22 = tpu.memref_squeeze %21 : memref<1x1024xi32, #tpu.memory_space<smem>> -> memref<1024xi32, #tpu.memory_space<smem>>
      %23 = tpu.memref_slice %arg10[%c0_i32_13] : memref<2x!tpu.dma_semaphore, #tpu.memory_space<semaphore_mem>> -> memref<1x!tpu.dma_semaphore, #tpu.memory_space<semaphore_mem>>
      %24 = tpu.memref_squeeze %23 : memref<1x!tpu.dma_semaphore, #tpu.memory_space<semaphore_mem>> -> memref<!tpu.dma_semaphore, #tpu.memory_space<semaphore_mem>>
      tpu.enqueue_dma source(%20 : memref<1024xi32, #tpu.memory_space<any>>) target(%22 : memref<1024xi32, #tpu.memory_space<smem>>) target_semaphore(%24 : memref<!tpu.dma_semaphore, #tpu.memory_space<semaphore_mem>>)
      %c0_16 = arith.constant 0 : index
      %c0_17 = arith.constant 0 : index
      %c0_18 = arith.constant 0 : index
      %25 = vector.load %arg3[%c0_16, %c0_17, %c0_18] : memref<1x256x32xbf16, #tpu.memory_space<vmem>>, vector<1x256x32xbf16>
      %26 = vector.shape_cast %25 : vector<1x256x32xbf16> to vector<256x32xbf16>
      %c0_19 = arith.constant 0 : index
      %c0_20 = arith.constant 0 : index
      %27 = vector.load %arg4[%c0_19, %c0_20] : memref<32x32xbf16, #tpu.memory_space<vmem>>, vector<32x32xbf16>
      %cst = arith.constant dense<0.000000e+00> : vector<256x32xf32>
      %28 = tpu.matmul %26, %27, %cst {dimension_numbers = #tpu.dot_dimension_numbers<[1], [0], [0], [1], [0, 0, 1, 1], [], []>} : vector<256x32xbf16>, vector<32x32xbf16>, vector<256x32xf32> -> vector<256x32xf32>
      %c0_21 = arith.constant 0 : index
      %c0_22 = arith.constant 0 : index
      %29 = vector.load %arg8[%c0_21, %c0_22] : memref<256x32xf32, #tpu.memory_space<vmem>>, vector<256x32xf32>
      tpu.vector_store %arg8[%c0_21, %c0_22], %28 {strides = array<i32>} : memref<256x32xf32, #tpu.memory_space<vmem>>, vector<256x32xf32>,
    } else {
    }
    %c1_i32_1 = arith.constant 1 : i32
    %4 = arith.addi %arg1, %c1_i32_1 : i32
    %c2_i32 = arith.constant 2 : i32
    %5 = arith.cmpi slt, %4, %c2_i32 : i32
    %6 = arith.extui %5 : i1 to i32
    %c0_i32_2 = arith.constant 0 : i32
    %7 = arith.cmpi ne, %6, %c0_i32_2 : i32
    scf.if %7 {
      %c1_i32_11 = arith.constant 1 : i32
      %19 = arith.addi %arg1, %c1_i32_11 : i32
      %c1_i32_12 = arith.constant 1 : i32
      %20 = arith.addi %arg1, %c1_i32_12 : i32
      %c1_i32_13 = arith.constant 1 : i32
      %21 = arith.andi %20, %c1_i32_13 : i32
      %c0_i32_14 = arith.constant 0 : i32
      %22 = tpu.memref_slice %arg2[%arg0, %19, %c0_i32_14] : memref<2x2x1024xi32, #tpu.memory_space<any>> -> memref<1x1x1024xi32, #tpu.memory_space<any>>
      %23 = tpu.memref_squeeze %22 : memref<1x1x1024xi32, #tpu.memory_space<any>> -> memref<1024xi32, #tpu.memory_space<any>>
      %c0_i32_15 = arith.constant 0 : i32
      %24 = tpu.memref_slice %arg9[%21, %c0_i32_15] : memref<2x1024xi32, #tpu.memory_space<smem>> -> memref<1x1024xi32, #tpu.memory_space<smem>>
      %25 = tpu.memref_squeeze %24 : memref<1x1024xi32, #tpu.memory_space<smem>> -> memref<1024xi32, #tpu.memory_space<smem>>
      %26 = tpu.memref_slice %arg10[%21] : memref<2x!tpu.dma_semaphore, #tpu.memory_space<semaphore_mem>> -> memref<1x!tpu.dma_semaphore, #tpu.memory_space<semaphore_mem>>
      %27 = tpu.memref_squeeze %26 : memref<1x!tpu.dma_semaphore, #tpu.memory_space<semaphore_mem>> -> memref<!tpu.dma_semaphore, #tpu.memory_space<semaphore_mem>>
      tpu.enqueue_dma source(%23 : memref<1024xi32, #tpu.memory_space<any>>) target(%25 : memref<1024xi32, #tpu.memory_space<smem>>) target_semaphore(%27 : memref<!tpu.dma_semaphore, #tpu.memory_space<semaphore_mem>>)
    } else {
    }
    %c0_i32_3 = arith.constant 0 : i32
    %8 = tpu.memref_slice %arg2[%arg0, %arg1, %c0_i32_3] : memref<2x2x1024xi32, #tpu.memory_space<any>> -> memref<1x1x1024xi32, #tpu.memory_space<any>>
    %9 = tpu.memref_squeeze %8 : memref<1x1x1024xi32, #tpu.memory_space<any>> -> memref<1024xi32, #tpu.memory_space<any>>
    %c0_i32_4 = arith.constant 0 : i32
    %10 = tpu.memref_slice %arg9[%0, %c0_i32_4] : memref<2x1024xi32, #tpu.memory_space<smem>> -> memref<1x1024xi32, #tpu.memory_space<smem>>
    %11 = tpu.memref_squeeze %10 : memref<1x1024xi32, #tpu.memory_space<smem>> -> memref<1024xi32, #tpu.memory_space<smem>>
    %12 = tpu.memref_slice %arg10[%0] : memref<2x!tpu.dma_semaphore, #tpu.memory_space<semaphore_mem>> -> memref<1x!tpu.dma_semaphore, #tpu.memory_space<semaphore_mem>>
    %13 = tpu.memref_squeeze %12 : memref<1x!tpu.dma_semaphore, #tpu.memory_space<semaphore_mem>> -> memref<!tpu.dma_semaphore, #tpu.memory_space<semaphore_mem>>
    tpu.wait_dma2 semaphore(%13 : memref<!tpu.dma_semaphore, #tpu.memory_space<semaphore_mem>>) src(%9 : memref<1024xi32, #tpu.memory_space<any>>) dst(%11 : memref<1024xi32, #tpu.memory_space<smem>>)
    %c128_i32 = arith.constant 128 : i32
    %14 = arith.muli %arg1, %c128_i32 : i32
    %15 = tpu.assume_multiple %14, 128 : i32
    %c0 = arith.constant 0 : index
    %c0_5 = arith.constant 0 : index
    %16 = vector.load %arg5[%c0, %c0_5] : memref<1x32xf32, #tpu.memory_space<vmem>>, vector<1x32xf32>
    %c0_6 = arith.constant 0 : index
    %c0_7 = arith.constant 0 : index
    %17 = vector.load %arg6[%c0_6, %c0_7] : memref<1x32xf32, #tpu.memory_space<vmem>>, vector<1x32xf32>
    %c0_i32_8 = arith.constant 0 : i32
    %c16_i32 = arith.constant 16 : i32
    %18 = arith.addi %c0_i32_8, %c16_i32 : i32
    %c1_i32_9 = arith.constant 1 : i32
    scf.for %arg11 = %c0_i32_8 to %18 step %c1_i32_9  : i32 {
      %c8_i32 = arith.constant 8 : i32
      %19 = arith.muli %arg11, %c8_i32 : i32
      %20 = tpu.assume_multiple %19, 8 : i32
      %c8_i32_11 = arith.constant 8 : i32
      %21 = arith.muli %20, %c8_i32_11 : i32
      %c0_i32_12 = arith.constant 0 : i32
      %22 = arith.addi %21, %c0_i32_12 : i32
      %c0_i32_13 = arith.constant 0 : i32
      %23 = arith.addi %22, %c0_i32_13 : i32
      %24 = arith.index_cast %0 : i32 to index
      %25 = arith.index_cast %23 : i32 to index
      %26 = memref.load %arg9[%24, %25] : memref<2x1024xi32, #tpu.memory_space<smem>>
      %27 = arith.index_cast %26 : i32 to index
      %c0_14 = arith.constant 0 : index
      %28 = vector.load %arg8[%27, %c0_14] : memref<256x32xf32, #tpu.memory_space<vmem>>, vector<1x32xf32>
      %c0_i32_15 = arith.constant 0 : i32
      %29 = arith.addi %21, %c0_i32_15 : i32
      %c1_i32_16 = arith.constant 1 : i32
      %30 = arith.addi %29, %c1_i32_16 : i32
      %31 = arith.index_cast %0 : i32 to index
      %32 = arith.index_cast %30 : i32 to index
      %33 = memref.load %arg9[%31, %32] : memref<2x1024xi32, #tpu.memory_space<smem>>
      %34 = arith.index_cast %33 : i32 to index
      %c0_17 = arith.constant 0 : index
      %35 = vector.load %arg8[%34, %c0_17] : memref<256x32xf32, #tpu.memory_space<vmem>>, vector<1x32xf32>
      %c0_i32_18 = arith.constant 0 : i32
      %36 = arith.addi %21, %c0_i32_18 : i32
      %c2_i32_19 = arith.constant 2 : i32
      %37 = arith.addi %36, %c2_i32_19 : i32
      %38 = arith.index_cast %0 : i32 to index
      %39 = arith.index_cast %37 : i32 to index
      %40 = memref.load %arg9[%38, %39] : memref<2x1024xi32, #tpu.memory_space<smem>>
      %41 = arith.index_cast %40 : i32 to index
      %c0_20 = arith.constant 0 : index
      %42 = vector.load %arg8[%41, %c0_20] : memref<256x32xf32, #tpu.memory_space<vmem>>, vector<1x32xf32>
      %c0_i32_21 = arith.constant 0 : i32
      %43 = arith.addi %21, %c0_i32_21 : i32
      %c3_i32 = arith.constant 3 : i32
      %44 = arith.addi %43, %c3_i32 : i32
      %45 = arith.index_cast %0 : i32 to index
      %46 = arith.index_cast %44 : i32 to index
      %47 = memref.load %arg9[%45, %46] : memref<2x1024xi32, #tpu.memory_space<smem>>
      %48 = arith.index_cast %47 : i32 to index
      %c0_22 = arith.constant 0 : index
      %49 = vector.load %arg8[%48, %c0_22] : memref<256x32xf32, #tpu.memory_space<vmem>>, vector<1x32xf32>
      %c0_i32_23 = arith.constant 0 : i32
      %50 = arith.addi %21, %c0_i32_23 : i32
      %c4_i32 = arith.constant 4 : i32
      %51 = arith.addi %50, %c4_i32 : i32
      %52 = arith.index_cast %0 : i32 to index
      %53 = arith.index_cast %51 : i32 to index
      %54 = memref.load %arg9[%52, %53] : memref<2x1024xi32, #tpu.memory_space<smem>>
      %55 = arith.index_cast %54 : i32 to index
      %c0_24 = arith.constant 0 : index
      %56 = vector.load %arg8[%55, %c0_24] : memref<256x32xf32, #tpu.memory_space<vmem>>, vector<1x32xf32>
      %c0_i32_25 = arith.constant 0 : i32
      %57 = arith.addi %21, %c0_i32_25 : i32
      %c5_i32 = arith.constant 5 : i32
      %58 = arith.addi %57, %c5_i32 : i32
      %59 = arith.index_cast %0 : i32 to index
      %60 = arith.index_cast %58 : i32 to index
      %61 = memref.load %arg9[%59, %60] : memref<2x1024xi32, #tpu.memory_space<smem>>
      %62 = arith.index_cast %61 : i32 to index
      %c0_26 = arith.constant 0 : index
      %63 = vector.load %arg8[%62, %c0_26] : memref<256x32xf32, #tpu.memory_space<vmem>>, vector<1x32xf32>
      %c0_i32_27 = arith.constant 0 : i32
      %64 = arith.addi %21, %c0_i32_27 : i32
      %c6_i32 = arith.constant 6 : i32
      %65 = arith.addi %64, %c6_i32 : i32
      %66 = arith.index_cast %0 : i32 to index
      %67 = arith.index_cast %65 : i32 to index
      %68 = memref.load %arg9[%66, %67] : memref<2x1024xi32, #tpu.memory_space<smem>>
      %69 = arith.index_cast %68 : i32 to index
      %c0_28 = arith.constant 0 : index
      %70 = vector.load %arg8[%69, %c0_28] : memref<256x32xf32, #tpu.memory_space<vmem>>, vector<1x32xf32>
      %c0_i32_29 = arith.constant 0 : i32
      %71 = arith.addi %21, %c0_i32_29 : i32
      %c7_i32 = arith.constant 7 : i32
      %72 = arith.addi %71, %c7_i32 : i32
      %73 = arith.index_cast %0 : i32 to index
      %74 = arith.index_cast %72 : i32 to index
      %75 = memref.load %arg9[%73, %74] : memref<2x1024xi32, #tpu.memory_space<smem>>
      %76 = arith.index_cast %75 : i32 to index
      %c0_30 = arith.constant 0 : index
      %77 = vector.load %arg8[%76, %c0_30] : memref<256x32xf32, #tpu.memory_space<vmem>>, vector<1x32xf32>
      %78 = arith.maximumf %28, %35 : vector<1x32xf32>
      %79 = arith.maximumf %42, %49 : vector<1x32xf32>
      %80 = arith.maximumf %56, %63 : vector<1x32xf32>
      %81 = arith.maximumf %70, %77 : vector<1x32xf32>
      %82 = arith.maximumf %78, %79 : vector<1x32xf32>
      %83 = arith.maximumf %80, %81 : vector<1x32xf32>
      %84 = arith.maximumf %82, %83 : vector<1x32xf32>
      %c8_i32_31 = arith.constant 8 : i32
      %85 = arith.addi %21, %c8_i32_31 : i32
      %c0_i32_32 = arith.constant 0 : i32
      %86 = arith.addi %85, %c0_i32_32 : i32
      %87 = arith.index_cast %0 : i32 to index
      %88 = arith.index_cast %86 : i32 to index
      %89 = memref.load %arg9[%87, %88] : memref<2x1024xi32, #tpu.memory_space<smem>>
      %90 = arith.index_cast %89 : i32 to index
      %c0_33 = arith.constant 0 : index
      %91 = vector.load %arg8[%90, %c0_33] : memref<256x32xf32, #tpu.memory_space<vmem>>, vector<1x32xf32>
      %c8_i32_34 = arith.constant 8 : i32
      %92 = arith.addi %21, %c8_i32_34 : i32
      %c1_i32_35 = arith.constant 1 : i32
      %93 = arith.addi %92, %c1_i32_35 : i32
      %94 = arith.index_cast %0 : i32 to index
      %95 = arith.index_cast %93 : i32 to index
      %96 = memref.load %arg9[%94, %95] : memref<2x1024xi32, #tpu.memory_space<smem>>
      %97 = arith.index_cast %96 : i32 to index
      %c0_36 = arith.constant 0 : index
      %98 = vector.load %arg8[%97, %c0_36] : memref<256x32xf32, #tpu.memory_space<vmem>>, vector<1x32xf32>
      %c8_i32_37 = arith.constant 8 : i32
      %99 = arith.addi %21, %c8_i32_37 : i32
      %c2_i32_38 = arith.constant 2 : i32
      %100 = arith.addi %99, %c2_i32_38 : i32
      %101 = arith.index_cast %0 : i32 to index
      %102 = arith.index_cast %100 : i32 to index
      %103 = memref.load %arg9[%101, %102] : memref<2x1024xi32, #tpu.memory_space<smem>>
      %104 = arith.index_cast %103 : i32 to index
      %c0_39 = arith.constant 0 : index
      %105 = vector.load %arg8[%104, %c0_39] : memref<256x32xf32, #tpu.memory_space<vmem>>, vector<1x32xf32>
      %c8_i32_40 = arith.constant 8 : i32
      %106 = arith.addi %21, %c8_i32_40 : i32
      %c3_i32_41 = arith.constant 3 : i32
      %107 = arith.addi %106, %c3_i32_41 : i32
      %108 = arith.index_cast %0 : i32 to index
      %109 = arith.index_cast %107 : i32 to index
      %110 = memref.load %arg9[%108, %109] : memref<2x1024xi32, #tpu.memory_space<smem>>
      %111 = arith.index_cast %110 : i32 to index
      %c0_42 = arith.constant 0 : index
      %112 = vector.load %arg8[%111, %c0_42] : memref<256x32xf32, #tpu.memory_space<vmem>>, vector<1x32xf32>
      %c8_i32_43 = arith.constant 8 : i32
      %113 = arith.addi %21, %c8_i32_43 : i32
      %c4_i32_44 = arith.constant 4 : i32
      %114 = arith.addi %113, %c4_i32_44 : i32
      %115 = arith.index_cast %0 : i32 to index
      %116 = arith.index_cast %114 : i32 to index
      %117 = memref.load %arg9[%115, %116] : memref<2x1024xi32, #tpu.memory_space<smem>>
      %118 = arith.index_cast %117 : i32 to index
      %c0_45 = arith.constant 0 : index
      %119 = vector.load %arg8[%118, %c0_45] : memref<256x32xf32, #tpu.memory_space<vmem>>, vector<1x32xf32>
      %c8_i32_46 = arith.constant 8 : i32
      %120 = arith.addi %21, %c8_i32_46 : i32
      %c5_i32_47 = arith.constant 5 : i32
      %121 = arith.addi %120, %c5_i32_47 : i32
      %122 = arith.index_cast %0 : i32 to index
      %123 = arith.index_cast %121 : i32 to index
      %124 = memref.load %arg9[%122, %123] : memref<2x1024xi32, #tpu.memory_space<smem>>
      %125 = arith.index_cast %124 : i32 to index
      %c0_48 = arith.constant 0 : index
      %126 = vector.load %arg8[%125, %c0_48] : memref<256x32xf32, #tpu.memory_space<vmem>>, vector<1x32xf32>
      %c8_i32_49 = arith.constant 8 : i32
      %127 = arith.addi %21, %c8_i32_49 : i32
      %c6_i32_50 = arith.constant 6 : i32
      %128 = arith.addi %127, %c6_i32_50 : i32
      %129 = arith.index_cast %0 : i32 to index
      %130 = arith.index_cast %128 : i32 to index
      %131 = memref.load %arg9[%129, %130] : memref<2x1024xi32, #tpu.memory_space<smem>>
      %132 = arith.index_cast %131 : i32 to index
      %c0_51 = arith.constant 0 : index
      %133 = vector.load %arg8[%132, %c0_51] : memref<256x32xf32, #tpu.memory_space<vmem>>, vector<1x32xf32>
      %c8_i32_52 = arith.constant 8 : i32
      %134 = arith.addi %21, %c8_i32_52 : i32
      %c7_i32_53 = arith.constant 7 : i32
      %135 = arith.addi %134, %c7_i32_53 : i32
      %136 = arith.index_cast %0 : i32 to index
      %137 = arith.index_cast %135 : i32 to index
      %138 = memref.load %arg9[%136, %137] : memref<2x1024xi32, #tpu.memory_space<smem>>
      %139 = arith.index_cast %138 : i32 to index
      %c0_54 = arith.constant 0 : index
      %140 = vector.load %arg8[%139, %c0_54] : memref<256x32xf32, #tpu.memory_space<vmem>>, vector<1x32xf32>
      %141 = arith.maximumf %91, %98 : vector<1x32xf32>
      %142 = arith.maximumf %105, %112 : vector<1x32xf32>
      %143 = arith.maximumf %119, %126 : vector<1x32xf32>
      %144 = arith.maximumf %133, %140 : vector<1x32xf32>
      %145 = arith.maximumf %141, %142 : vector<1x32xf32>
      %146 = arith.maximumf %143, %144 : vector<1x32xf32>
      %147 = arith.maximumf %145, %146 : vector<1x32xf32>
      %c16_i32_55 = arith.constant 16 : i32
      %148 = arith.addi %21, %c16_i32_55 : i32
      %c0_i32_56 = arith.constant 0 : i32
      %149 = arith.addi %148, %c0_i32_56 : i32
      %150 = arith.index_cast %0 : i32 to index
      %151 = arith.index_cast %149 : i32 to index
      %152 = memref.load %arg9[%150, %151] : memref<2x1024xi32, #tpu.memory_space<smem>>
      %153 = arith.index_cast %152 : i32 to index
      %c0_57 = arith.constant 0 : index
      %154 = vector.load %arg8[%153, %c0_57] : memref<256x32xf32, #tpu.memory_space<vmem>>, vector<1x32xf32>
      %c16_i32_58 = arith.constant 16 : i32
      %155 = arith.addi %21, %c16_i32_58 : i32
      %c1_i32_59 = arith.constant 1 : i32
      %156 = arith.addi %155, %c1_i32_59 : i32
      %157 = arith.index_cast %0 : i32 to index
      %158 = arith.index_cast %156 : i32 to index
      %159 = memref.load %arg9[%157, %158] : memref<2x1024xi32, #tpu.memory_space<smem>>
      %160 = arith.index_cast %159 : i32 to index
      %c0_60 = arith.constant 0 : index
      %161 = vector.load %arg8[%160, %c0_60] : memref<256x32xf32, #tpu.memory_space<vmem>>, vector<1x32xf32>
      %c16_i32_61 = arith.constant 16 : i32
      %162 = arith.addi %21, %c16_i32_61 : i32
      %c2_i32_62 = arith.constant 2 : i32
      %163 = arith.addi %162, %c2_i32_62 : i32
      %164 = arith.index_cast %0 : i32 to index
      %165 = arith.index_cast %163 : i32 to index
      %166 = memref.load %arg9[%164, %165] : memref<2x1024xi32, #tpu.memory_space<smem>>
      %167 = arith.index_cast %166 : i32 to index
      %c0_63 = arith.constant 0 : index
      %168 = vector.load %arg8[%167, %c0_63] : memref<256x32xf32, #tpu.memory_space<vmem>>, vector<1x32xf32>
      %c16_i32_64 = arith.constant 16 : i32
      %169 = arith.addi %21, %c16_i32_64 : i32
      %c3_i32_65 = arith.constant 3 : i32
      %170 = arith.addi %169, %c3_i32_65 : i32
      %171 = arith.index_cast %0 : i32 to index
      %172 = arith.index_cast %170 : i32 to index
      %173 = memref.load %arg9[%171, %172] : memref<2x1024xi32, #tpu.memory_space<smem>>
      %174 = arith.index_cast %173 : i32 to index
      %c0_66 = arith.constant 0 : index
      %175 = vector.load %arg8[%174, %c0_66] : memref<256x32xf32, #tpu.memory_space<vmem>>, vector<1x32xf32>
      %c16_i32_67 = arith.constant 16 : i32
      %176 = arith.addi %21, %c16_i32_67 : i32
      %c4_i32_68 = arith.constant 4 : i32
      %177 = arith.addi %176, %c4_i32_68 : i32
      %178 = arith.index_cast %0 : i32 to index
      %179 = arith.index_cast %177 : i32 to index
      %180 = memref.load %arg9[%178, %179] : memref<2x1024xi32, #tpu.memory_space<smem>>
      %181 = arith.index_cast %180 : i32 to index
      %c0_69 = arith.constant 0 : index
      %182 = vector.load %arg8[%181, %c0_69] : memref<256x32xf32, #tpu.memory_space<vmem>>, vector<1x32xf32>
      %c16_i32_70 = arith.constant 16 : i32
      %183 = arith.addi %21, %c16_i32_70 : i32
      %c5_i32_71 = arith.constant 5 : i32
      %184 = arith.addi %183, %c5_i32_71 : i32
      %185 = arith.index_cast %0 : i32 to index
      %186 = arith.index_cast %184 : i32 to index
      %187 = memref.load %arg9[%185, %186] : memref<2x1024xi32, #tpu.memory_space<smem>>
      %188 = arith.index_cast %187 : i32 to index
      %c0_72 = arith.constant 0 : index
      %189 = vector.load %arg8[%188, %c0_72] : memref<256x32xf32, #tpu.memory_space<vmem>>, vector<1x32xf32>
      %c16_i32_73 = arith.constant 16 : i32
      %190 = arith.addi %21, %c16_i32_73 : i32
      %c6_i32_74 = arith.constant 6 : i32
      %191 = arith.addi %190, %c6_i32_74 : i32
      %192 = arith.index_cast %0 : i32 to index
      %193 = arith.index_cast %191 : i32 to index
      %194 = memref.load %arg9[%192, %193] : memref<2x1024xi32, #tpu.memory_space<smem>>
      %195 = arith.index_cast %194 : i32 to index
      %c0_75 = arith.constant 0 : index
      %196 = vector.load %arg8[%195, %c0_75] : memref<256x32xf32, #tpu.memory_space<vmem>>, vector<1x32xf32>
      %c16_i32_76 = arith.constant 16 : i32
      %197 = arith.addi %21, %c16_i32_76 : i32
      %c7_i32_77 = arith.constant 7 : i32
      %198 = arith.addi %197, %c7_i32_77 : i32
      %199 = arith.index_cast %0 : i32 to index
      %200 = arith.index_cast %198 : i32 to index
      %201 = memref.load %arg9[%199, %200] : memref<2x1024xi32, #tpu.memory_space<smem>>
      %202 = arith.index_cast %201 : i32 to index
      %c0_78 = arith.constant 0 : index
      %203 = vector.load %arg8[%202, %c0_78] : memref<256x32xf32, #tpu.memory_space<vmem>>, vector<1x32xf32>
      %204 = arith.maximumf %154, %161 : vector<1x32xf32>
      %205 = arith.maximumf %168, %175 : vector<1x32xf32>
      %206 = arith.maximumf %182, %189 : vector<1x32xf32>
      %207 = arith.maximumf %196, %203 : vector<1x32xf32>
      %208 = arith.maximumf %204, %205 : vector<1x32xf32>
      %209 = arith.maximumf %206, %207 : vector<1x32xf32>
      %210 = arith.maximumf %208, %209 : vector<1x32xf32>
      %c24_i32 = arith.constant 24 : i32
      %211 = arith.addi %21, %c24_i32 : i32
      %c0_i32_79 = arith.constant 0 : i32
      %212 = arith.addi %211, %c0_i32_79 : i32
      %213 = arith.index_cast %0 : i32 to index
      %214 = arith.index_cast %212 : i32 to index
      %215 = memref.load %arg9[%213, %214] : memref<2x1024xi32, #tpu.memory_space<smem>>
      %216 = arith.index_cast %215 : i32 to index
      %c0_80 = arith.constant 0 : index
      %217 = vector.load %arg8[%216, %c0_80] : memref<256x32xf32, #tpu.memory_space<vmem>>, vector<1x32xf32>
      %c24_i32_81 = arith.constant 24 : i32
      %218 = arith.addi %21, %c24_i32_81 : i32
      %c1_i32_82 = arith.constant 1 : i32
      %219 = arith.addi %218, %c1_i32_82 : i32
      %220 = arith.index_cast %0 : i32 to index
      %221 = arith.index_cast %219 : i32 to index
      %222 = memref.load %arg9[%220, %221] : memref<2x1024xi32, #tpu.memory_space<smem>>
      %223 = arith.index_cast %222 : i32 to index
      %c0_83 = arith.constant 0 : index
      %224 = vector.load %arg8[%223, %c0_83] : memref<256x32xf32, #tpu.memory_space<vmem>>, vector<1x32xf32>
      %c24_i32_84 = arith.constant 24 : i32
      %225 = arith.addi %21, %c24_i32_84 : i32
      %c2_i32_85 = arith.constant 2 : i32
      %226 = arith.addi %225, %c2_i32_85 : i32
      %227 = arith.index_cast %0 : i32 to index
      %228 = arith.index_cast %226 : i32 to index
      %229 = memref.load %arg9[%227, %228] : memref<2x1024xi32, #tpu.memory_space<smem>>
      %230 = arith.index_cast %229 : i32 to index
      %c0_86 = arith.constant 0 : index
      %231 = vector.load %arg8[%230, %c0_86] : memref<256x32xf32, #tpu.memory_space<vmem>>, vector<1x32xf32>
      %c24_i32_87 = arith.constant 24 : i32
      %232 = arith.addi %21, %c24_i32_87 : i32
      %c3_i32_88 = arith.constant 3 : i32
      %233 = arith.addi %232, %c3_i32_88 : i32
      %234 = arith.index_cast %0 : i32 to index
      %235 = arith.index_cast %233 : i32 to index
      %236 = memref.load %arg9[%234, %235] : memref<2x1024xi32, #tpu.memory_space<smem>>
      %237 = arith.index_cast %236 : i32 to index
      %c0_89 = arith.constant 0 : index
      %238 = vector.load %arg8[%237, %c0_89] : memref<256x32xf32, #tpu.memory_space<vmem>>, vector<1x32xf32>
      %c24_i32_90 = arith.constant 24 : i32
      %239 = arith.addi %21, %c24_i32_90 : i32
      %c4_i32_91 = arith.constant 4 : i32
      %240 = arith.addi %239, %c4_i32_91 : i32
      %241 = arith.index_cast %0 : i32 to index
      %242 = arith.index_cast %240 : i32 to index
      %243 = memref.load %arg9[%241, %242] : memref<2x1024xi32, #tpu.memory_space<smem>>
      %244 = arith.index_cast %243 : i32 to index
      %c0_92 = arith.constant 0 : index
      %245 = vector.load %arg8[%244, %c0_92] : memref<256x32xf32, #tpu.memory_space<vmem>>, vector<1x32xf32>
      %c24_i32_93 = arith.constant 24 : i32
      %246 = arith.addi %21, %c24_i32_93 : i32
      %c5_i32_94 = arith.constant 5 : i32
      %247 = arith.addi %246, %c5_i32_94 : i32
      %248 = arith.index_cast %0 : i32 to index
      %249 = arith.index_cast %247 : i32 to index
      %250 = memref.load %arg9[%248, %249] : memref<2x1024xi32, #tpu.memory_space<smem>>
      %251 = arith.index_cast %250 : i32 to index
      %c0_95 = arith.constant 0 : index
      %252 = vector.load %arg8[%251, %c0_95] : memref<256x32xf32, #tpu.memory_space<vmem>>, vector<1x32xf32>
      %c24_i32_96 = arith.constant 24 : i32
      %253 = arith.addi %21, %c24_i32_96 : i32
      %c6_i32_97 = arith.constant 6 : i32
      %254 = arith.addi %253, %c6_i32_97 : i32
      %255 = arith.index_cast %0 : i32 to index
      %256 = arith.index_cast %254 : i32 to index
      %257 = memref.load %arg9[%255, %256] : memref<2x1024xi32, #tpu.memory_space<smem>>
      %258 = arith.index_cast %257 : i32 to index
      %c0_98 = arith.constant 0 : index
      %259 = vector.load %arg8[%258, %c0_98] : memref<256x32xf32, #tpu.memory_space<vmem>>, vector<1x32xf32>
      %c24_i32_99 = arith.constant 24 : i32
      %260 = arith.addi %21, %c24_i32_99 : i32
      %c7_i32_100 = arith.constant 7 : i32
      %261 = arith.addi %260, %c7_i32_100 : i32
      %262 = arith.index_cast %0 : i32 to index
      %263 = arith.index_cast %261 : i32 to index
      %264 = memref.load %arg9[%262, %263] : memref<2x1024xi32, #tpu.memory_space<smem>>
      %265 = arith.index_cast %264 : i32 to index
      %c0_101 = arith.constant 0 : index
      %266 = vector.load %arg8[%265, %c0_101] : memref<256x32xf32, #tpu.memory_space<vmem>>, vector<1x32xf32>
      %267 = arith.maximumf %217, %224 : vector<1x32xf32>
      %268 = arith.maximumf %231, %238 : vector<1x32xf32>
      %269 = arith.maximumf %245, %252 : vector<1x32xf32>
      %270 = arith.maximumf %259, %266 : vector<1x32xf32>
      %271 = arith.maximumf %267, %268 : vector<1x32xf32>
      %272 = arith.maximumf %269, %270 : vector<1x32xf32>
      %273 = arith.maximumf %271, %272 : vector<1x32xf32>
      %c32_i32 = arith.constant 32 : i32
      %274 = arith.addi %21, %c32_i32 : i32
      %c0_i32_102 = arith.constant 0 : i32
      %275 = arith.addi %274, %c0_i32_102 : i32
      %276 = arith.index_cast %0 : i32 to index
      %277 = arith.index_cast %275 : i32 to index
      %278 = memref.load %arg9[%276, %277] : memref<2x1024xi32, #tpu.memory_space<smem>>
      %279 = arith.index_cast %278 : i32 to index
      %c0_103 = arith.constant 0 : index
      %280 = vector.load %arg8[%279, %c0_103] : memref<256x32xf32, #tpu.memory_space<vmem>>, vector<1x32xf32>
      %c32_i32_104 = arith.constant 32 : i32
      %281 = arith.addi %21, %c32_i32_104 : i32
      %c1_i32_105 = arith.constant 1 : i32
      %282 = arith.addi %281, %c1_i32_105 : i32
      %283 = arith.index_cast %0 : i32 to index
      %284 = arith.index_cast %282 : i32 to index
      %285 = memref.load %arg9[%283, %284] : memref<2x1024xi32, #tpu.memory_space<smem>>
      %286 = arith.index_cast %285 : i32 to index
      %c0_106 = arith.constant 0 : index
      %287 = vector.load %arg8[%286, %c0_106] : memref<256x32xf32, #tpu.memory_space<vmem>>, vector<1x32xf32>
      %c32_i32_107 = arith.constant 32 : i32
      %288 = arith.addi %21, %c32_i32_107 : i32
      %c2_i32_108 = arith.constant 2 : i32
      %289 = arith.addi %288, %c2_i32_108 : i32
      %290 = arith.index_cast %0 : i32 to index
      %291 = arith.index_cast %289 : i32 to index
      %292 = memref.load %arg9[%290, %291] : memref<2x1024xi32, #tpu.memory_space<smem>>
      %293 = arith.index_cast %292 : i32 to index
      %c0_109 = arith.constant 0 : index
      %294 = vector.load %arg8[%293, %c0_109] : memref<256x32xf32, #tpu.memory_space<vmem>>, vector<1x32xf32>
      %c32_i32_110 = arith.constant 32 : i32
      %295 = arith.addi %21, %c32_i32_110 : i32
      %c3_i32_111 = arith.constant 3 : i32
      %296 = arith.addi %295, %c3_i32_111 : i32
      %297 = arith.index_cast %0 : i32 to index
      %298 = arith.index_cast %296 : i32 to index
      %299 = memref.load %arg9[%297, %298] : memref<2x1024xi32, #tpu.memory_space<smem>>
      %300 = arith.index_cast %299 : i32 to index
      %c0_112 = arith.constant 0 : index
      %301 = vector.load %arg8[%300, %c0_112] : memref<256x32xf32, #tpu.memory_space<vmem>>, vector<1x32xf32>
      %c32_i32_113 = arith.constant 32 : i32
      %302 = arith.addi %21, %c32_i32_113 : i32
      %c4_i32_114 = arith.constant 4 : i32
      %303 = arith.addi %302, %c4_i32_114 : i32
      %304 = arith.index_cast %0 : i32 to index
      %305 = arith.index_cast %303 : i32 to index
      %306 = memref.load %arg9[%304, %305] : memref<2x1024xi32, #tpu.memory_space<smem>>
      %307 = arith.index_cast %306 : i32 to index
      %c0_115 = arith.constant 0 : index
      %308 = vector.load %arg8[%307, %c0_115] : memref<256x32xf32, #tpu.memory_space<vmem>>, vector<1x32xf32>
      %c32_i32_116 = arith.constant 32 : i32
      %309 = arith.addi %21, %c32_i32_116 : i32
      %c5_i32_117 = arith.constant 5 : i32
      %310 = arith.addi %309, %c5_i32_117 : i32
      %311 = arith.index_cast %0 : i32 to index
      %312 = arith.index_cast %310 : i32 to index
      %313 = memref.load %arg9[%311, %312] : memref<2x1024xi32, #tpu.memory_space<smem>>
      %314 = arith.index_cast %313 : i32 to index
      %c0_118 = arith.constant 0 : index
      %315 = vector.load %arg8[%314, %c0_118] : memref<256x32xf32, #tpu.memory_space<vmem>>, vector<1x32xf32>
      %c32_i32_119 = arith.constant 32 : i32
      %316 = arith.addi %21, %c32_i32_119 : i32
      %c6_i32_120 = arith.constant 6 : i32
      %317 = arith.addi %316, %c6_i32_120 : i32
      %318 = arith.index_cast %0 : i32 to index
      %319 = arith.index_cast %317 : i32 to index
      %320 = memref.load %arg9[%318, %319] : memref<2x1024xi32, #tpu.memory_space<smem>>
      %321 = arith.index_cast %320 : i32 to index
      %c0_121 = arith.constant 0 : index
      %322 = vector.load %arg8[%321, %c0_121] : memref<256x32xf32, #tpu.memory_space<vmem>>, vector<1x32xf32>
      %c32_i32_122 = arith.constant 32 : i32
      %323 = arith.addi %21, %c32_i32_122 : i32
      %c7_i32_123 = arith.constant 7 : i32
      %324 = arith.addi %323, %c7_i32_123 : i32
      %325 = arith.index_cast %0 : i32 to index
      %326 = arith.index_cast %324 : i32 to index
      %327 = memref.load %arg9[%325, %326] : memref<2x1024xi32, #tpu.memory_space<smem>>
      %328 = arith.index_cast %327 : i32 to index
      %c0_124 = arith.constant 0 : index
      %329 = vector.load %arg8[%328, %c0_124] : memref<256x32xf32, #tpu.memory_space<vmem>>, vector<1x32xf32>
      %330 = arith.maximumf %280, %287 : vector<1x32xf32>
      %331 = arith.maximumf %294, %301 : vector<1x32xf32>
      %332 = arith.maximumf %308, %315 : vector<1x32xf32>
      %333 = arith.maximumf %322, %329 : vector<1x32xf32>
      %334 = arith.maximumf %330, %331 : vector<1x32xf32>
      %335 = arith.maximumf %332, %333 : vector<1x32xf32>
      %336 = arith.maximumf %334, %335 : vector<1x32xf32>
      %c40_i32 = arith.constant 40 : i32
      %337 = arith.addi %21, %c40_i32 : i32
      %c0_i32_125 = arith.constant 0 : i32
      %338 = arith.addi %337, %c0_i32_125 : i32
      %339 = arith.index_cast %0 : i32 to index
      %340 = arith.index_cast %338 : i32 to index
      %341 = memref.load %arg9[%339, %340] : memref<2x1024xi32, #tpu.memory_space<smem>>
      %342 = arith.index_cast %341 : i32 to index
      %c0_126 = arith.constant 0 : index
      %343 = vector.load %arg8[%342, %c0_126] : memref<256x32xf32, #tpu.memory_space<vmem>>, vector<1x32xf32>
      %c40_i32_127 = arith.constant 40 : i32
      %344 = arith.addi %21, %c40_i32_127 : i32
      %c1_i32_128 = arith.constant 1 : i32
      %345 = arith.addi %344, %c1_i32_128 : i32
      %346 = arith.index_cast %0 : i32 to index
      %347 = arith.index_cast %345 : i32 to index
      %348 = memref.load %arg9[%346, %347] : memref<2x1024xi32, #tpu.memory_space<smem>>
      %349 = arith.index_cast %348 : i32 to index
      %c0_129 = arith.constant 0 : index
      %350 = vector.load %arg8[%349, %c0_129] : memref<256x32xf32, #tpu.memory_space<vmem>>, vector<1x32xf32>
      %c40_i32_130 = arith.constant 40 : i32
      %351 = arith.addi %21, %c40_i32_130 : i32
      %c2_i32_131 = arith.constant 2 : i32
      %352 = arith.addi %351, %c2_i32_131 : i32
      %353 = arith.index_cast %0 : i32 to index
      %354 = arith.index_cast %352 : i32 to index
      %355 = memref.load %arg9[%353, %354] : memref<2x1024xi32, #tpu.memory_space<smem>>
      %356 = arith.index_cast %355 : i32 to index
      %c0_132 = arith.constant 0 : index
      %357 = vector.load %arg8[%356, %c0_132] : memref<256x32xf32, #tpu.memory_space<vmem>>, vector<1x32xf32>
      %c40_i32_133 = arith.constant 40 : i32
      %358 = arith.addi %21, %c40_i32_133 : i32
      %c3_i32_134 = arith.constant 3 : i32
      %359 = arith.addi %358, %c3_i32_134 : i32
      %360 = arith.index_cast %0 : i32 to index
      %361 = arith.index_cast %359 : i32 to index
      %362 = memref.load %arg9[%360, %361] : memref<2x1024xi32, #tpu.memory_space<smem>>
      %363 = arith.index_cast %362 : i32 to index
      %c0_135 = arith.constant 0 : index
      %364 = vector.load %arg8[%363, %c0_135] : memref<256x32xf32, #tpu.memory_space<vmem>>, vector<1x32xf32>
      %c40_i32_136 = arith.constant 40 : i32
      %365 = arith.addi %21, %c40_i32_136 : i32
      %c4_i32_137 = arith.constant 4 : i32
      %366 = arith.addi %365, %c4_i32_137 : i32
      %367 = arith.index_cast %0 : i32 to index
      %368 = arith.index_cast %366 : i32 to index
      %369 = memref.load %arg9[%367, %368] : memref<2x1024xi32, #tpu.memory_space<smem>>
      %370 = arith.index_cast %369 : i32 to index
      %c0_138 = arith.constant 0 : index
      %371 = vector.load %arg8[%370, %c0_138] : memref<256x32xf32, #tpu.memory_space<vmem>>, vector<1x32xf32>
      %c40_i32_139 = arith.constant 40 : i32
      %372 = arith.addi %21, %c40_i32_139 : i32
      %c5_i32_140 = arith.constant 5 : i32
      %373 = arith.addi %372, %c5_i32_140 : i32
      %374 = arith.index_cast %0 : i32 to index
      %375 = arith.index_cast %373 : i32 to index
      %376 = memref.load %arg9[%374, %375] : memref<2x1024xi32, #tpu.memory_space<smem>>
      %377 = arith.index_cast %376 : i32 to index
      %c0_141 = arith.constant 0 : index
      %378 = vector.load %arg8[%377, %c0_141] : memref<256x32xf32, #tpu.memory_space<vmem>>, vector<1x32xf32>
      %c40_i32_142 = arith.constant 40 : i32
      %379 = arith.addi %21, %c40_i32_142 : i32
      %c6_i32_143 = arith.constant 6 : i32
      %380 = arith.addi %379, %c6_i32_143 : i32
      %381 = arith.index_cast %0 : i32 to index
      %382 = arith.index_cast %380 : i32 to index
      %383 = memref.load %arg9[%381, %382] : memref<2x1024xi32, #tpu.memory_space<smem>>
      %384 = arith.index_cast %383 : i32 to index
      %c0_144 = arith.constant 0 : index
      %385 = vector.load %arg8[%384, %c0_144] : memref<256x32xf32, #tpu.memory_space<vmem>>, vector<1x32xf32>
      %c40_i32_145 = arith.constant 40 : i32
      %386 = arith.addi %21, %c40_i32_145 : i32
      %c7_i32_146 = arith.constant 7 : i32
      %387 = arith.addi %386, %c7_i32_146 : i32
      %388 = arith.index_cast %0 : i32 to index
      %389 = arith.index_cast %387 : i32 to index
      %390 = memref.load %arg9[%388, %389] : memref<2x1024xi32, #tpu.memory_space<smem>>
      %391 = arith.index_cast %390 : i32 to index
      %c0_147 = arith.constant 0 : index
      %392 = vector.load %arg8[%391, %c0_147] : memref<256x32xf32, #tpu.memory_space<vmem>>, vector<1x32xf32>
      %393 = arith.maximumf %343, %350 : vector<1x32xf32>
      %394 = arith.maximumf %357, %364 : vector<1x32xf32>
      %395 = arith.maximumf %371, %378 : vector<1x32xf32>
      %396 = arith.maximumf %385, %392 : vector<1x32xf32>
      %397 = arith.maximumf %393, %394 : vector<1x32xf32>
      %398 = arith.maximumf %395, %396 : vector<1x32xf32>
      %399 = arith.maximumf %397, %398 : vector<1x32xf32>
      %c48_i32 = arith.constant 48 : i32
      %400 = arith.addi %21, %c48_i32 : i32
      %c0_i32_148 = arith.constant 0 : i32
      %401 = arith.addi %400, %c0_i32_148 : i32
      %402 = arith.index_cast %0 : i32 to index
      %403 = arith.index_cast %401 : i32 to index
      %404 = memref.load %arg9[%402, %403] : memref<2x1024xi32, #tpu.memory_space<smem>>
      %405 = arith.index_cast %404 : i32 to index
      %c0_149 = arith.constant 0 : index
      %406 = vector.load %arg8[%405, %c0_149] : memref<256x32xf32, #tpu.memory_space<vmem>>, vector<1x32xf32>
      %c48_i32_150 = arith.constant 48 : i32
      %407 = arith.addi %21, %c48_i32_150 : i32
      %c1_i32_151 = arith.constant 1 : i32
      %408 = arith.addi %407, %c1_i32_151 : i32
      %409 = arith.index_cast %0 : i32 to index
      %410 = arith.index_cast %408 : i32 to index
      %411 = memref.load %arg9[%409, %410] : memref<2x1024xi32, #tpu.memory_space<smem>>
      %412 = arith.index_cast %411 : i32 to index
      %c0_152 = arith.constant 0 : index
      %413 = vector.load %arg8[%412, %c0_152] : memref<256x32xf32, #tpu.memory_space<vmem>>, vector<1x32xf32>
      %c48_i32_153 = arith.constant 48 : i32
      %414 = arith.addi %21, %c48_i32_153 : i32
      %c2_i32_154 = arith.constant 2 : i32
      %415 = arith.addi %414, %c2_i32_154 : i32
      %416 = arith.index_cast %0 : i32 to index
      %417 = arith.index_cast %415 : i32 to index
      %418 = memref.load %arg9[%416, %417] : memref<2x1024xi32, #tpu.memory_space<smem>>
      %419 = arith.index_cast %418 : i32 to index
      %c0_155 = arith.constant 0 : index
      %420 = vector.load %arg8[%419, %c0_155] : memref<256x32xf32, #tpu.memory_space<vmem>>, vector<1x32xf32>
      %c48_i32_156 = arith.constant 48 : i32
      %421 = arith.addi %21, %c48_i32_156 : i32
      %c3_i32_157 = arith.constant 3 : i32
      %422 = arith.addi %421, %c3_i32_157 : i32
      %423 = arith.index_cast %0 : i32 to index
      %424 = arith.index_cast %422 : i32 to index
      %425 = memref.load %arg9[%423, %424] : memref<2x1024xi32, #tpu.memory_space<smem>>
      %426 = arith.index_cast %425 : i32 to index
      %c0_158 = arith.constant 0 : index
      %427 = vector.load %arg8[%426, %c0_158] : memref<256x32xf32, #tpu.memory_space<vmem>>, vector<1x32xf32>
      %c48_i32_159 = arith.constant 48 : i32
      %428 = arith.addi %21, %c48_i32_159 : i32
      %c4_i32_160 = arith.constant 4 : i32
      %429 = arith.addi %428, %c4_i32_160 : i32
      %430 = arith.index_cast %0 : i32 to index
      %431 = arith.index_cast %429 : i32 to index
      %432 = memref.load %arg9[%430, %431] : memref<2x1024xi32, #tpu.memory_space<smem>>
      %433 = arith.index_cast %432 : i32 to index
      %c0_161 = arith.constant 0 : index
      %434 = vector.load %arg8[%433, %c0_161] : memref<256x32xf32, #tpu.memory_space<vmem>>, vector<1x32xf32>
      %c48_i32_162 = arith.constant 48 : i32
      %435 = arith.addi %21, %c48_i32_162 : i32
      %c5_i32_163 = arith.constant 5 : i32
      %436 = arith.addi %435, %c5_i32_163 : i32
      %437 = arith.index_cast %0 : i32 to index
      %438 = arith.index_cast %436 : i32 to index
      %439 = memref.load %arg9[%437, %438] : memref<2x1024xi32, #tpu.memory_space<smem>>
      %440 = arith.index_cast %439 : i32 to index
      %c0_164 = arith.constant 0 : index
      %441 = vector.load %arg8[%440, %c0_164] : memref<256x32xf32, #tpu.memory_space<vmem>>, vector<1x32xf32>
      %c48_i32_165 = arith.constant 48 : i32
      %442 = arith.addi %21, %c48_i32_165 : i32
      %c6_i32_166 = arith.constant 6 : i32
      %443 = arith.addi %442, %c6_i32_166 : i32
      %444 = arith.index_cast %0 : i32 to index
      %445 = arith.index_cast %443 : i32 to index
      %446 = memref.load %arg9[%444, %445] : memref<2x1024xi32, #tpu.memory_space<smem>>
      %447 = arith.index_cast %446 : i32 to index
      %c0_167 = arith.constant 0 : index
      %448 = vector.load %arg8[%447, %c0_167] : memref<256x32xf32, #tpu.memory_space<vmem>>, vector<1x32xf32>
      %c48_i32_168 = arith.constant 48 : i32
      %449 = arith.addi %21, %c48_i32_168 : i32
      %c7_i32_169 = arith.constant 7 : i32
      %450 = arith.addi %449, %c7_i32_169 : i32
      %451 = arith.index_cast %0 : i32 to index
      %452 = arith.index_cast %450 : i32 to index
      %453 = memref.load %arg9[%451, %452] : memref<2x1024xi32, #tpu.memory_space<smem>>
      %454 = arith.index_cast %453 : i32 to index
      %c0_170 = arith.constant 0 : index
      %455 = vector.load %arg8[%454, %c0_170] : memref<256x32xf32, #tpu.memory_space<vmem>>, vector<1x32xf32>
      %456 = arith.maximumf %406, %413 : vector<1x32xf32>
      %457 = arith.maximumf %420, %427 : vector<1x32xf32>
      %458 = arith.maximumf %434, %441 : vector<1x32xf32>
      %459 = arith.maximumf %448, %455 : vector<1x32xf32>
      %460 = arith.maximumf %456, %457 : vector<1x32xf32>
      %461 = arith.maximumf %458, %459 : vector<1x32xf32>
      %462 = arith.maximumf %460, %461 : vector<1x32xf32>
      %c56_i32 = arith.constant 56 : i32
      %463 = arith.addi %21, %c56_i32 : i32
      %c0_i32_171 = arith.constant 0 : i32
      %464 = arith.addi %463, %c0_i32_171 : i32
      %465 = arith.index_cast %0 : i32 to index
      %466 = arith.index_cast %464 : i32 to index
      %467 = memref.load %arg9[%465, %466] : memref<2x1024xi32, #tpu.memory_space<smem>>
      %468 = arith.index_cast %467 : i32 to index
      %c0_172 = arith.constant 0 : index
      %469 = vector.load %arg8[%468, %c0_172] : memref<256x32xf32, #tpu.memory_space<vmem>>, vector<1x32xf32>
      %c56_i32_173 = arith.constant 56 : i32
      %470 = arith.addi %21, %c56_i32_173 : i32
      %c1_i32_174 = arith.constant 1 : i32
      %471 = arith.addi %470, %c1_i32_174 : i32
      %472 = arith.index_cast %0 : i32 to index
      %473 = arith.index_cast %471 : i32 to index
      %474 = memref.load %arg9[%472, %473] : memref<2x1024xi32, #tpu.memory_space<smem>>
      %475 = arith.index_cast %474 : i32 to index
      %c0_175 = arith.constant 0 : index
      %476 = vector.load %arg8[%475, %c0_175] : memref<256x32xf32, #tpu.memory_space<vmem>>, vector<1x32xf32>
      %c56_i32_176 = arith.constant 56 : i32
      %477 = arith.addi %21, %c56_i32_176 : i32
      %c2_i32_177 = arith.constant 2 : i32
      %478 = arith.addi %477, %c2_i32_177 : i32
      %479 = arith.index_cast %0 : i32 to index
      %480 = arith.index_cast %478 : i32 to index
      %481 = memref.load %arg9[%479, %480] : memref<2x1024xi32, #tpu.memory_space<smem>>
      %482 = arith.index_cast %481 : i32 to index
      %c0_178 = arith.constant 0 : index
      %483 = vector.load %arg8[%482, %c0_178] : memref<256x32xf32, #tpu.memory_space<vmem>>, vector<1x32xf32>
      %c56_i32_179 = arith.constant 56 : i32
      %484 = arith.addi %21, %c56_i32_179 : i32
      %c3_i32_180 = arith.constant 3 : i32
      %485 = arith.addi %484, %c3_i32_180 : i32
      %486 = arith.index_cast %0 : i32 to index
      %487 = arith.index_cast %485 : i32 to index
      %488 = memref.load %arg9[%486, %487] : memref<2x1024xi32, #tpu.memory_space<smem>>
      %489 = arith.index_cast %488 : i32 to index
      %c0_181 = arith.constant 0 : index
      %490 = vector.load %arg8[%489, %c0_181] : memref<256x32xf32, #tpu.memory_space<vmem>>, vector<1x32xf32>
      %c56_i32_182 = arith.constant 56 : i32
      %491 = arith.addi %21, %c56_i32_182 : i32
      %c4_i32_183 = arith.constant 4 : i32
      %492 = arith.addi %491, %c4_i32_183 : i32
      %493 = arith.index_cast %0 : i32 to index
      %494 = arith.index_cast %492 : i32 to index
      %495 = memref.load %arg9[%493, %494] : memref<2x1024xi32, #tpu.memory_space<smem>>
      %496 = arith.index_cast %495 : i32 to index
      %c0_184 = arith.constant 0 : index
      %497 = vector.load %arg8[%496, %c0_184] : memref<256x32xf32, #tpu.memory_space<vmem>>, vector<1x32xf32>
      %c56_i32_185 = arith.constant 56 : i32
      %498 = arith.addi %21, %c56_i32_185 : i32
      %c5_i32_186 = arith.constant 5 : i32
      %499 = arith.addi %498, %c5_i32_186 : i32
      %500 = arith.index_cast %0 : i32 to index
      %501 = arith.index_cast %499 : i32 to index
      %502 = memref.load %arg9[%500, %501] : memref<2x1024xi32, #tpu.memory_space<smem>>
      %503 = arith.index_cast %502 : i32 to index
      %c0_187 = arith.constant 0 : index
      %504 = vector.load %arg8[%503, %c0_187] : memref<256x32xf32, #tpu.memory_space<vmem>>, vector<1x32xf32>
      %c56_i32_188 = arith.constant 56 : i32
      %505 = arith.addi %21, %c56_i32_188 : i32
      %c6_i32_189 = arith.constant 6 : i32
      %506 = arith.addi %505, %c6_i32_189 : i32
      %507 = arith.index_cast %0 : i32 to index
      %508 = arith.index_cast %506 : i32 to index
      %509 = memref.load %arg9[%507, %508] : memref<2x1024xi32, #tpu.memory_space<smem>>
      %510 = arith.index_cast %509 : i32 to index
      %c0_190 = arith.constant 0 : index
      %511 = vector.load %arg8[%510, %c0_190] : memref<256x32xf32, #tpu.memory_space<vmem>>, vector<1x32xf32>
      %c56_i32_191 = arith.constant 56 : i32
      %512 = arith.addi %21, %c56_i32_191 : i32
      %c7_i32_192 = arith.constant 7 : i32
      %513 = arith.addi %512, %c7_i32_192 : i32
      %514 = arith.index_cast %0 : i32 to index
      %515 = arith.index_cast %513 : i32 to index
      %516 = memref.load %arg9[%514, %515] : memref<2x1024xi32, #tpu.memory_space<smem>>
      %517 = arith.index_cast %516 : i32 to index
      %c0_193 = arith.constant 0 : index
      %518 = vector.load %arg8[%517, %c0_193] : memref<256x32xf32, #tpu.memory_space<vmem>>, vector<1x32xf32>
      %519 = arith.maximumf %469, %476 : vector<1x32xf32>
      %520 = arith.maximumf %483, %490 : vector<1x32xf32>
      %521 = arith.maximumf %497, %504 : vector<1x32xf32>
      %522 = arith.maximumf %511, %518 : vector<1x32xf32>
      %523 = arith.maximumf %519, %520 : vector<1x32xf32>
      %524 = arith.maximumf %521, %522 : vector<1x32xf32>
      %525 = arith.maximumf %523, %524 : vector<1x32xf32>
      %526 = tpu.concatenate %84, %147, %210, %273, %336, %399, %462, %525 in 0 : vector<1x32xf32>, vector<1x32xf32>, vector<1x32xf32>, vector<1x32xf32>, vector<1x32xf32>, vector<1x32xf32>, vector<1x32xf32>, vector<1x32xf32> -> vector<8x32xf32>
      %527 = arith.addi %15, %20 : i32
      %528 = tpu.assume_multiple %527, 8 : i32
      %529 = arith.index_cast %528 : i32 to index
      %c0_194 = arith.constant 0 : index
      %530 = vector.load %arg8[%529, %c0_194] : memref<256x32xf32, #tpu.memory_space<vmem>>, vector<8x32xf32>
      %531 = arith.subf %526, %530 : vector<8x32xf32>
      %532 = vector.broadcast %16 : vector<1x32xf32> to vector<8x32xf32>
      %533 = arith.mulf %531, %532 : vector<8x32xf32>
      %534 = vector.broadcast %17 : vector<1x32xf32> to vector<8x32xf32>
      %535 = arith.addf %533, %534 : vector<8x32xf32>
      %c0_195 = arith.constant 0 : index
      %536 = arith.index_cast %20 : i32 to index
      %c0_196 = arith.constant 0 : index
      %537 = vector.load %arg7[%c0_195, %536, %c0_196] : memref<1x128x32xf32, #tpu.memory_space<vmem>>, vector<1x8x32xf32>
      %538 = vector.shape_cast %537 : vector<1x8x32xf32> to vector<8x32xf32>
      %539 = vector.shape_cast %535 : vector<8x32xf32> to vector<1x8x32xf32>
      tpu.vector_store %arg7[%c0_195, %536, %c0_196], %539 {strides = array<i32>} : memref<1x128x32xf32, #tpu.memory_space<vmem>>, vector<1x8x32xf32>,
    }
    %c16_i32_10 = arith.constant 16 : i32
    return
  }
  func.func @transform_1(%arg0: i32, %arg1: i32) -> (i32, i32, i32) {
    %c0_i32 = arith.constant 0 : i32
    %c0_i32_0 = arith.constant 0 : i32
    %c0_i32_1 = arith.constant 0 : i32
    return %arg0, %c0_i32, %c0_i32_0 : i32, i32, i32
  }
  func.func @transform_2(%arg0: i32, %arg1: i32) -> (i32, i32) {
    %c0_i32 = arith.constant 0 : i32
    %c0_i32_0 = arith.constant 0 : i32
    %c0_i32_1 = arith.constant 0 : i32
    return %c0_i32, %c0_i32_0 : i32, i32
  }
  func.func @transform_3(%arg0: i32, %arg1: i32) -> (i32, i32) {
    %c0_i32 = arith.constant 0 : i32
    %c0_i32_0 = arith.constant 0 : i32
    %c0_i32_1 = arith.constant 0 : i32
    return %c0_i32, %c0_i32_0 : i32, i32
  }
  func.func @transform_4(%arg0: i32, %arg1: i32) -> (i32, i32) {
    %c0_i32 = arith.constant 0 : i32
    %c0_i32_0 = arith.constant 0 : i32
    %c0_i32_1 = arith.constant 0 : i32
    return %c0_i32, %c0_i32_0 : i32, i32
  }
  func.func @transform_5(%arg0: i32, %arg1: i32) -> (i32, i32, i32) {
    %c0_i32 = arith.constant 0 : i32
    %c0_i32_0 = arith.constant 0 : i32
    return %arg0, %arg1, %c0_i32 : i32, i32, i32
  }
}

</mosaic_0001>

<llo_original>
// kernel: tpu_custom_call.1
$region0: #{tpu_custom_call.1}
  #allocation0 [shape = 'u32[]', space=smem, size = 0x4, offset = 0x4, fixed_abs, tag = 'smem constant byte address 0x4 - core index']
  #allocation1 [shape = 'u32[72,128]{1,0:T(1,128)}', space=vmem, size = 0x9000, scoped, tag = 'internal scratch']
  #allocation2 [shape = 'f32[256,32]{1,0:T(8,128)}', space=vmem, size = 0x20000, scoped, tag = 'scratch operand']
  #allocation3 [shape = 's32[2,1024]{1,0:T(2,128)}', space=smem, size = 0x2000, scoped, tag = 'scratch operand']
  #allocation4 [shape = 's32[2]{0}', space=sflag, size = 0x8, scoped, tag = 'scratch operand']
  #allocation5 [shape = 's32[]', space=sflag, size = 0x4, offset = 0, fixed_abs, tag = 'sflag constant byte address 0x0 - dummy sync flag']
  #allocation6 [shape = 's32[]', space=sflag, size = 0x4, offset = 0, fixed_abs, tag = 'sflag constant byte address 0x0 - dummy sync flag']
  %s0 = inlined_call_operand.vmem [shape: s32[2,2,1024], index: 0, kind: input, shape index: {}]
  %s1 = inlined_call_operand.vmem [shape: bf16[2,256,32], index: 1, kind: input, shape index: {}]
  %s2 = inlined_call_operand.vmem [shape: bf16[32,32], index: 2, kind: input, shape index: {}]
  %s3 = inlined_call_operand.vmem [shape: f32[1,32], index: 3, kind: input, shape index: {}]
  %s4 = inlined_call_operand.vmem [shape: f32[1,32], index: 4, kind: input, shape index: {}]
  %s5 = inlined_call_operand.vmem [shape: f32[2,256,32], index: 5, kind: output, shape index: {}]
  %s6 = sld [smem:[#allocation0]]
  $region64: #{tpu_custom_call.1} parent=0
    _
  %s8 = ssub.s32 1, %s6
  %s9 = scalar_select 0, %s8, %s6
  loop: start=0, step=1, limit=6
  $region2: #{tpu_custom_call.1} parent=0 // loop_pre_header
    _
  $region3: #{tpu_custom_call.1} parent=0 // loop_header
    %s11 = sphi 0, %s15
    %p12 = scmp.ge.s32.totalorder %s11, 6
    %s18 = sphi 0, %s30
    %s19 = sphi 0, %s26
    %s20 = sphi 0, %s18
    %s21 = sphi 0, %s19
    %s22 = sphi 0, %s20
    %s23 = sphi 0, %s21
    %s33 = sphi 0, %s35
    %s36 = sphi 0, %s33
    %s37 = sphi 0, %s36
    %s53 = sphi 0, %s37
    %s57 = sphi 0, %s57
    %s59 = sphi 0, %s57
    %s60 = sphi 0, %s59
    %s74 = sphi 0, %s60
    %s78 = sphi 0, %s78
    %s80 = sphi 0, %s78
    %s81 = sphi 0, %s80
    %s95 = sphi 0, %s81
    %s99 = sphi 0, %s99
    %s101 = sphi 0, %s99
    %s102 = sphi 0, %s101
    %s116 = sphi 0, %s102
    %s124 = sphi 0, %s126
    %s127 = sphi 0, %s124
    %s128 = sphi 0, %s127
    %s144 = sphi 0, %s128
  $region4: #{tpu_custom_call.1} parent=0 // loop_header_branch
    %14 = sbr.rel (%p12) target = $region8
  $region5: #{tpu_custom_call.1} parent=0 // loop_body
    %s16 = ssub.s32 %s11, 1
    %s17 = ssub.s32 %s11, 2
    %s24 = sadd.s32 1, %s19
    %p25 = scmp.ge.s32.totalorder %s24, 2
    %s26 = scalar_select %p25, 0, %s24
    %s27 = sadd.s32 1, %s18
    %s28 = scalar_select %p25, %s27, %s18
    %p29 = scmp.ge.s32.totalorder %s28, 2
    %s30 = scalar_select %p29, 0, %s28
    %s31 = ssub.s32 %s18, %s30
    %p32 = scmp.eq.s32.totalorder %s31, 0
    %s34 = sadd.s32 %s33, 1
    %s35 = scalar_select %p32, %s33, %s34
    %p38 = pneg %p32
    %p39 = scmp.eq.s32.totalorder %s11, 3
    %p40 = por %p38, %p39
    %p41 = scmp.ne.s32.totalorder %s33, %s36
    %p42 = scmp.eq.s32.totalorder %s11, 0
    %p43 = por %p41, %p42
    %p44 = scmp.ne.s32.totalorder %s33, %s36
    %p45 = scmp.eq.s32.totalorder %s16, 3
    %p46 = por %p44, %p45
    %p47 = scmp.ne.s32.totalorder %s36, %s37
    %p48 = scmp.eq.s32.totalorder %s16, 0
    %p49 = por %p47, %p48
    %p50 = scmp.ne.s32.totalorder %s36, %s37
    %p51 = scmp.eq.s32.totalorder %s17, 3
    %p52 = por %p50, %p51
    %p54 = scmp.ne.s32.totalorder %s37, %s53
    %p55 = scmp.eq.s32.totalorder %s17, 0
    %p56 = por %p54, %p55
    %s58 = sadd.s32 %s57, 1
    %p61 = scmp.eq.s32.totalorder %s11, 3
    %p62 = scmp.ne.s32.totalorder %s57, %s59
    %p63 = scmp.eq.s32.totalorder %s11, 0
    %p64 = por %p62, %p63
    %p65 = scmp.ne.s32.totalorder %s57, %s59
    %p66 = scmp.eq.s32.totalorder %s16, 3
    %p67 = por %p65, %p66
    %p68 = scmp.ne.s32.totalorder %s59, %s60
    %p69 = scmp.eq.s32.totalorder %s16, 0
    %p70 = por %p68, %p69
    %p71 = scmp.ne.s32.totalorder %s59, %s60
    %p72 = scmp.eq.s32.totalorder %s17, 3
    %p73 = por %p71, %p72
    %p75 = scmp.ne.s32.totalorder %s60, %s74
    %p76 = scmp.eq.s32.totalorder %s17, 0
    %p77 = por %p75, %p76
    %s79 = sadd.s32 %s78, 1
    %p82 = scmp.eq.s32.totalorder %s11, 3
    %p83 = scmp.ne.s32.totalorder %s78, %s80
    %p84 = scmp.eq.s32.totalorder %s11, 0
    %p85 = por %p83, %p84
    %p86 = scmp.ne.s32.totalorder %s78, %s80
    %p87 = scmp.eq.s32.totalorder %s16, 3
    %p88 = por %p86, %p87
    %p89 = scmp.ne.s32.totalorder %s80, %s81
    %p90 = scmp.eq.s32.totalorder %s16, 0
    %p91 = por %p89, %p90
    %p92 = scmp.ne.s32.totalorder %s80, %s81
    %p93 = scmp.eq.s32.totalorder %s17, 3
    %p94 = por %p92, %p93
    %p96 = scmp.ne.s32.totalorder %s81, %s95
    %p97 = scmp.eq.s32.totalorder %s17, 0
    %p98 = por %p96, %p97
    %s100 = sadd.s32 %s99, 1
    %p103 = scmp.eq.s32.totalorder %s11, 3
    %p104 = scmp.ne.s32.totalorder %s99, %s101
    %p105 = scmp.eq.s32.totalorder %s11, 0
    %p106 = por %p104, %p105
    %p107 = scmp.ne.s32.totalorder %s99, %s101
    %p108 = scmp.eq.s32.totalorder %s16, 3
    %p109 = por %p107, %p108
    %p110 = scmp.ne.s32.totalorder %s101, %s102
    %p111 = scmp.eq.s32.totalorder %s16, 0
    %p112 = por %p110, %p111
    %p113 = scmp.ne.s32.totalorder %s101, %s102
    %p114 = scmp.eq.s32.totalorder %s17, 3
    %p115 = por %p113, %p114
    %p117 = scmp.ne.s32.totalorder %s102, %s116
    %p118 = scmp.eq.s32.totalorder %s17, 0
    %p119 = por %p117, %p118
    %s120 = ssub.s32 %s18, %s30
    %s121 = ssub.s32 %s19, %s26
    %s122 = sor.u32 %s120, %s121
    %p123 = scmp.eq.s32.totalorder %s122, 0
    %s125 = sadd.s32 %s124, 1
    %s126 = scalar_select %p123, %s124, %s125
    %p129 = pneg %p123
    %p130 = scmp.eq.s32.totalorder %s11, 3
    %p131 = por %p129, %p130
    %p132 = scmp.ne.s32.totalorder %s124, %s127
    %p133 = scmp.eq.s32.totalorder %s11, 0
    %p134 = por %p132, %p133
    %p135 = scmp.ne.s32.totalorder %s124, %s127
    %p136 = scmp.eq.s32.totalorder %s16, 3
    %p137 = por %p135, %p136
    %p138 = scmp.ne.s32.totalorder %s127, %s128
    %p139 = scmp.eq.s32.totalorder %s16, 0
    %p140 = por %p138, %p139
    %p141 = scmp.ne.s32.totalorder %s127, %s128
    %p142 = scmp.eq.s32.totalorder %s17, 3
    %p143 = por %p141, %p142
    %p145 = scmp.ne.s32.totalorder %s128, %s144
    %p146 = scmp.eq.s32.totalorder %s17, 0
    %p147 = por %p145, %p146
    %p148 = scmp.le.s32.totalorder 1, %s11
    %p149 = scmp.lt.s32.totalorder %s11, 5
    %p150 = pnand %p148, %p149
    %p151 = pneg %p150
    // Predicated region
    $region9: #{tpu_custom_call.1} parent=5 // pred_check
      _
    $region10: #{tpu_custom_call.1} parent=5 // pred_check_branch
      %153 = sbr.rel (%p150) target = $region12
    $region11: #{tpu_custom_call.1} parent=5 // pred_region
      %s154 = ssub.s32 %s11, 1
      // Predicated region
      $region13: #{tpu_custom_call.1} parent=11 // pred_check
        %p155 = pneg %p70
      $region14: #{tpu_custom_call.1} parent=11 // pred_check_branch
        %157 = sbr.rel (%p155) target = $region16
      $region15: #{tpu_custom_call.1} parent=11 // pred_region
        _
      $region16: #{tpu_custom_call.1} parent=11 // pred_fallthru
        _
      // Predicated region
      $region17: #{tpu_custom_call.1} parent=11 // pred_check
        %p158 = pneg %p91
      $region18: #{tpu_custom_call.1} parent=11 // pred_check_branch
        %160 = sbr.rel (%p158) target = $region20
      $region19: #{tpu_custom_call.1} parent=11 // pred_region
        _
      $region20: #{tpu_custom_call.1} parent=11 // pred_fallthru
        _
      // Predicated region
      $region21: #{tpu_custom_call.1} parent=11 // pred_check
        %p161 = pneg %p112
      $region22: #{tpu_custom_call.1} parent=11 // pred_check_branch
        %163 = sbr.rel (%p161) target = $region24
      $region23: #{tpu_custom_call.1} parent=11 // pred_region
        _
      $region24: #{tpu_custom_call.1} parent=11 // pred_fallthru
        _
    $region12: #{tpu_custom_call.1} parent=5 // pred_fallthru
      _
    %p164 = scmp.lt.s32.totalorder %s11, 4
    // Predicated region
    $region25: #{tpu_custom_call.1} parent=5 // pred_check
      %p165 = pneg %p164
    $region26: #{tpu_custom_call.1} parent=5 // pred_check_branch
      %167 = sbr.rel (%p165) target = $region28
    $region27: #{tpu_custom_call.1} parent=5 // pred_region
      // Predicated region
      $region29: #{tpu_custom_call.1} parent=27 // pred_check
        %p168 = pneg %p43
      $region30: #{tpu_custom_call.1} parent=27 // pred_check_branch
        %170 = sbr.rel (%p168) target = $region32
      $region31: #{tpu_custom_call.1} parent=27 // pred_region
        %p171 = scmp.lt.s32.totalorder %s18, 1
        %s172 = scalar_select %p171, %s18, 1
        %s173 = smul.addr %s172, 32
        %s174 = smul.addr %s173, 4
        %s175 = scalar_lea.vmem %s1, %s174
      $region32: #{tpu_custom_call.1} parent=27 // pred_fallthru
        _
    $region28: #{tpu_custom_call.1} parent=5 // pred_fallthru
      _
    %p176 = scmp.le.s32.totalorder 1, %s11
    %p177 = scmp.lt.s32.totalorder %s11, 5
    %p178 = pnand %p176, %p177
    %p179 = pneg %p178
    // Predicated region
    $region33: #{tpu_custom_call.1} parent=5 // pred_check
      _
    $region34: #{tpu_custom_call.1} parent=5 // pred_check_branch
      %181 = sbr.rel (%p178) target = $region36
    $region35: #{tpu_custom_call.1} parent=5 // pred_region
      %s182 = ssub.s32 %s11, 1
      %p183 = scmp.lt.s32.totalorder %s20, 1
      %s184 = scalar_select %p183, %s20, 1
      %s185 = smul.addr %s184, 32
      %s186 = smul.addr %s185, 4
      %s187 = scalar_lea.vmem %s1, %s186
      %p188 = pneg %p49
      %p189 = pneg %p46
      %p190 = pneg %p70
      %p191 = pneg %p67
      %p192 = pneg %p91
      %p193 = pneg %p88
      %p194 = pneg %p112
      %p195 = pneg %p109
      %p196 = pneg %p140
      %p197 = pneg %p137
      %s198 = smul.u32 16, %s21
      %p199 = scmp.lt.s32.totalorder %s20, 1
      %s200 = scalar_select %p199, %s20, 1
      %p201 = scmp.lt.s32.totalorder %s198, 31
      %s202 = scalar_select %p201, %s198, 31
      %s203 = smul.addr %s200, 32
      %s204 = sadd.s32 %s202, %s203
      %s205 = smul.addr %s204, 8
      %s206 = scalar_lea.vmem %s5, %s205
      %p207 = scmp.lt.s32.totalorder %s20, 1
      %s208 = scalar_select %p207, %s20, 1
      %s209 = smul.addr %s208, 32
      %s210 = smul.addr %s209, 4
      %s211 = scalar_lea.vmem %s1, %s210
      %s212 = smul.u32 16, %s21
      %p213 = scmp.lt.s32.totalorder %s20, 1
      %s214 = scalar_select %p213, %s20, 1
      %p215 = scmp.lt.s32.totalorder %s212, 31
      %s216 = scalar_select %p215, %s212, 31
      %s217 = smul.addr %s214, 32
      %s218 = sadd.s32 %s216, %s217
      %s219 = smul.addr %s218, 8
      %s220 = scalar_lea.vmem %s5, %s219
      %s221 = smul.u32 16, %s21
      %s223 = sand.u32 %s21, 1
      %p224 = scmp.eq.s32.totalorder %s21, 0
      // Predicated region
      $region37: #{tpu_custom_call.1} parent=35 // pred_check
        %p225 = pneg %p224
      $region38: #{tpu_custom_call.1} parent=35 // pred_check_branch
        %227 = sbr.rel (%p225) target = $region40
      $region39: #{tpu_custom_call.1} parent=35 // pred_region
        %s228 = smul.u32 %s20, 16
        %s229 = scalar_lea.vmem %s0, %s228
        %s230 = sshll.u32 %s229, 4
        %s231 = int_to_ptr.vmem [resolvable:$true] %s230
        %235 = dma.vmem_to_smem %s231, 128, [#allocation3], [#allocation4], 32, 32, 1
        %v236 = vld [vmem:[%s211] sm:$0xf]
        %v237 = vld [vmem:[%s211 + $0x4] sm:$0xf]
        %v238 = vld [vmem:[%s211 + $0x8] sm:$0xf]
        %v239 = vld [vmem:[%s211 + $0xc] sm:$0xf]
        %v240 = vld [vmem:[%s211 + $0x10] sm:$0xf]
        %v241 = vld [vmem:[%s211 + $0x14] sm:$0xf]
        %v242 = vld [vmem:[%s211 + $0x18] sm:$0xf]
        %v243 = vld [vmem:[%s211 + $0x1c] sm:$0xf]
        %v244 = vld [vmem:[%s211 + $0x20] sm:$0xf]
        %v245 = vld [vmem:[%s211 + $0x24] sm:$0xf]
        %v246 = vld [vmem:[%s211 + $0x28] sm:$0xf]
        %v247 = vld [vmem:[%s211 + $0x2c] sm:$0xf]
        %v248 = vld [vmem:[%s211 + $0x30] sm:$0xf]
        %v249 = vld [vmem:[%s211 + $0x34] sm:$0xf]
        %v250 = vld [vmem:[%s211 + $0x38] sm:$0xf]
        %v251 = vld [vmem:[%s211 + $0x3c] sm:$0xf]
        %v252 = vld [vmem:[%s211 + $0x40] sm:$0xf]
        %v253 = vld [vmem:[%s211 + $0x44] sm:$0xf]
        %v254 = vld [vmem:[%s211 + $0x48] sm:$0xf]
        %v255 = vld [vmem:[%s211 + $0x4c] sm:$0xf]
        %v256 = vld [vmem:[%s211 + $0x50] sm:$0xf]
        %v257 = vld [vmem:[%s211 + $0x54] sm:$0xf]
        %v258 = vld [vmem:[%s211 + $0x58] sm:$0xf]
        %v259 = vld [vmem:[%s211 + $0x5c] sm:$0xf]
        %v260 = vld [vmem:[%s211 + $0x60] sm:$0xf]
        %v261 = vld [vmem:[%s211 + $0x64] sm:$0xf]
        %v262 = vld [vmem:[%s211 + $0x68] sm:$0xf]
        %v263 = vld [vmem:[%s211 + $0x6c] sm:$0xf]
        %v264 = vld [vmem:[%s211 + $0x70] sm:$0xf]
        %v265 = vld [vmem:[%s211 + $0x74] sm:$0xf]
        %v266 = vld [vmem:[%s211 + $0x78] sm:$0xf]
        %v267 = vld [vmem:[%s211 + $0x7c] sm:$0xf]
        %v268 = vld [vmem:[%s2] sm:$0xf]
        %v269 = vld [vmem:[%s2 + $0x4] sm:$0xf]
        %v270 = vld [vmem:[%s2 + $0x8] sm:$0xf]
        %v271 = vld [vmem:[%s2 + $0xc] sm:$0xf]
        %v304 = vunpack.c.l.b16 %v236
        %v305 = vunpack.c.l.b16 %v237
        %v306 = vunpack.c.l.b16 %v238
        %v307 = vunpack.c.l.b16 %v239
        %v308 = vunpack.c.l.b16 %v240
        %v309 = vunpack.c.l.b16 %v241
        %v310 = vunpack.c.l.b16 %v242
        %v311 = vunpack.c.l.b16 %v243
        %v312 = vunpack.c.l.b16 %v244
        %v313 = vunpack.c.l.b16 %v245
        %v314 = vunpack.c.l.b16 %v246
        %v315 = vunpack.c.l.b16 %v247
        %v316 = vunpack.c.l.b16 %v248
        %v317 = vunpack.c.l.b16 %v249
        %v318 = vunpack.c.l.b16 %v250
        %v319 = vunpack.c.l.b16 %v251
        %v320 = vunpack.c.l.b16 %v252
        %v321 = vunpack.c.l.b16 %v253
        %v322 = vunpack.c.l.b16 %v254
        %v323 = vunpack.c.l.b16 %v255
        %v324 = vunpack.c.l.b16 %v256
        %v325 = vunpack.c.l.b16 %v257
        %v326 = vunpack.c.l.b16 %v258
        %v327 = vunpack.c.l.b16 %v259
        %v328 = vunpack.c.l.b16 %v260
        %v329 = vunpack.c.l.b16 %v261
        %v330 = vunpack.c.l.b16 %v262
        %v331 = vunpack.c.l.b16 %v263
        %v332 = vunpack.c.l.b16 %v264
        %v333 = vunpack.c.l.b16 %v265
        %v334 = vunpack.c.l.b16 %v266
        %v335 = vunpack.c.l.b16 %v267
        %v336 = vpack.c.b16 %v305, %v304
        %v337 = vpack.c.b16 %v307, %v306
        %v338 = vpack.c.b16 %v309, %v308
        %v339 = vpack.c.b16 %v311, %v310
        %v340 = vpack.c.b16 %v313, %v312
        %v341 = vpack.c.b16 %v315, %v314
        %v342 = vpack.c.b16 %v317, %v316
        %v343 = vpack.c.b16 %v319, %v318
        %v344 = vpack.c.b16 %v321, %v320
        %v345 = vpack.c.b16 %v323, %v322
        %v346 = vpack.c.b16 %v325, %v324
        %v347 = vpack.c.b16 %v327, %v326
        %v348 = vpack.c.b16 %v329, %v328
        %v349 = vpack.c.b16 %v331, %v330
        %v350 = vpack.c.b16 %v333, %v332
        %v351 = vpack.c.b16 %v335, %v334
        %v356 = vunpack.c.l.b16 %v268
        %v357 = vunpack.c.l.b16 %v269
        %v358 = vunpack.c.l.b16 %v270
        %v359 = vunpack.c.l.b16 %v271
        %v360 = vpack.c.b16 %v357, %v356
        %v361 = vpack.c.b16 %v359, %v358
        %vm364 = vcmask 261120
        %v366 = vsel %vm364, %v336, 0
        %v369 = vsel %vm364, %v337, 0
        %v372 = vsel %vm364, %v338, 0
        %v375 = vsel %vm364, %v339, 0
        %v378 = vsel %vm364, %v340, 0
        %v381 = vsel %vm364, %v341, 0
        %v384 = vsel %vm364, %v342, 0
        %v387 = vsel %vm364, %v343, 0
        %v390 = vsel %vm364, %v344, 0
        %v393 = vsel %vm364, %v345, 0
        %v396 = vsel %vm364, %v346, 0
        %v399 = vsel %vm364, %v347, 0
        %v402 = vsel %vm364, %v348, 0
        %v405 = vsel %vm364, %v349, 0
        %v408 = vsel %vm364, %v350, 0
        %v411 = vsel %vm364, %v351, 0
        %413 = vmatpush.bf16.msra.mxu0 0
        %414 = vmatpush.bf16.msra.mxu0 0
        %415 = vmatpush.bf16.msra.mxu0 0
        %416 = vmatpush.bf16.msra.mxu0 0
        %417 = vmatpush.bf16.msra.mxu0 0
        %418 = vmatpush.bf16.msra.mxu0 0
        %419 = vmatpush.bf16.msra.mxu0 %v361
        %420 = vmatpush.bf16.msra.mxu0 %v360
        %421 = vmatmul.bf16.gmra.mxu0 %v366
        %v422 = vpop.f32.mrf.mxu0
        %v423 = vadd.f32 0.0, %v422
        %v424 = vpop.f32.mrf.mxu0
        %v425 = vadd.f32 0.0, %v424
        %426 = vmatmul.bf16.gmra.mxu0 %v369
        %v427 = vpop.f32.mrf.mxu0
        %v428 = vadd.f32 0.0, %v427
        %v429 = vpop.f32.mrf.mxu0
        %v430 = vadd.f32 0.0, %v429
        %431 = vmatmul.bf16.gmra.mxu0 %v372
        %v432 = vpop.f32.mrf.mxu0
        %v433 = vadd.f32 0.0, %v432
        %v434 = vpop.f32.mrf.mxu0
        %v435 = vadd.f32 0.0, %v434
        %436 = vmatmul.bf16.gmra.mxu0 %v375
        %v437 = vpop.f32.mrf.mxu0
        %v438 = vadd.f32 0.0, %v437
        %v439 = vpop.f32.mrf.mxu0
        %v440 = vadd.f32 0.0, %v439
        %441 = vmatmul.bf16.gmra.mxu0 %v378
        %v442 = vpop.f32.mrf.mxu0
        %v443 = vadd.f32 0.0, %v442
        %v444 = vpop.f32.mrf.mxu0
        %v445 = vadd.f32 0.0, %v444
        %446 = vmatmul.bf16.gmra.mxu0 %v381
        %v447 = vpop.f32.mrf.mxu0
        %v448 = vadd.f32 0.0, %v447
        %v449 = vpop.f32.mrf.mxu0
        %v450 = vadd.f32 0.0, %v449
        %451 = vmatmul.bf16.gmra.mxu0 %v384
        %v452 = vpop.f32.mrf.mxu0
        %v453 = vadd.f32 0.0, %v452
        %v454 = vpop.f32.mrf.mxu0
        %v455 = vadd.f32 0.0, %v454
        %456 = vmatmul.bf16.gmra.mxu0 %v387
        %v457 = vpop.f32.mrf.mxu0
        %v458 = vadd.f32 0.0, %v457
        %v459 = vpop.f32.mrf.mxu0
        %v460 = vadd.f32 0.0, %v459
        %461 = vmatmul.bf16.gmra.mxu0 %v390
        %v462 = vpop.f32.mrf.mxu0
        %v463 = vadd.f32 0.0, %v462
        %v464 = vpop.f32.mrf.mxu0
        %v465 = vadd.f32 0.0, %v464
        %466 = vmatmul.bf16.gmra.mxu0 %v393
        %v467 = vpop.f32.mrf.mxu0
        %v468 = vadd.f32 0.0, %v467
        %v469 = vpop.f32.mrf.mxu0
        %v470 = vadd.f32 0.0, %v469
        %471 = vmatmul.bf16.gmra.mxu0 %v396
        %v472 = vpop.f32.mrf.mxu0
        %v473 = vadd.f32 0.0, %v472
        %v474 = vpop.f32.mrf.mxu0
        %v475 = vadd.f32 0.0, %v474
        %476 = vmatmul.bf16.gmra.mxu0 %v399
        %v477 = vpop.f32.mrf.mxu0
        %v478 = vadd.f32 0.0, %v477
        %v479 = vpop.f32.mrf.mxu0
        %v480 = vadd.f32 0.0, %v479
        %481 = vmatmul.bf16.gmra.mxu0 %v402
        %v482 = vpop.f32.mrf.mxu0
        %v483 = vadd.f32 0.0, %v482
        %v484 = vpop.f32.mrf.mxu0
        %v485 = vadd.f32 0.0, %v484
        %486 = vmatmul.bf16.gmra.mxu0 %v405
        %v487 = vpop.f32.mrf.mxu0
        %v488 = vadd.f32 0.0, %v487
        %v489 = vpop.f32.mrf.mxu0
        %v490 = vadd.f32 0.0, %v489
        %491 = vmatmul.bf16.gmra.mxu0 %v408
        %v492 = vpop.f32.mrf.mxu0
        %v493 = vadd.f32 0.0, %v492
        %v494 = vpop.f32.mrf.mxu0
        %v495 = vadd.f32 0.0, %v494
        %496 = vmatmul.bf16.gmra.mxu0 %v411
        %v497 = vpop.f32.mrf.mxu0
        %v498 = vadd.f32 0.0, %v497
        %v499 = vpop.f32.mrf.mxu0
        %v500 = vadd.f32 0.0, %v499
        %501 = vdwg.mxu0
        %502 = vst.msk [vmem:[#allocation2] sm:$0xff] %vm364, %v423
        %503 = vst.msk [vmem:[#allocation2 + $0x8] sm:$0xff] %vm364, %v425
        %504 = vst.msk [vmem:[#allocation2 + $0x10] sm:$0xff] %vm364, %v428
        %505 = vst.msk [vmem:[#allocation2 + $0x18] sm:$0xff] %vm364, %v430
        %506 = vst.msk [vmem:[#allocation2 + $0x20] sm:$0xff] %vm364, %v433
        %507 = vst.msk [vmem:[#allocation2 + $0x28] sm:$0xff] %vm364, %v435
        %508 = vst.msk [vmem:[#allocation2 + $0x30] sm:$0xff] %vm364, %v438
        %509 = vst.msk [vmem:[#allocation2 + $0x38] sm:$0xff] %vm364, %v440
        %510 = vst.msk [vmem:[#allocation2 + $0x40] sm:$0xff] %vm364, %v443
        %511 = vst.msk [vmem:[#allocation2 + $0x48] sm:$0xff] %vm364, %v445
        %512 = vst.msk [vmem:[#allocation2 + $0x50] sm:$0xff] %vm364, %v448
        %513 = vst.msk [vmem:[#allocation2 + $0x58] sm:$0xff] %vm364, %v450
        %514 = vst.msk [vmem:[#allocation2 + $0x60] sm:$0xff] %vm364, %v453
        %515 = vst.msk [vmem:[#allocation2 + $0x68] sm:$0xff] %vm364, %v455
        %516 = vst.msk [vmem:[#allocation2 + $0x70] sm:$0xff] %vm364, %v458
        %517 = vst.msk [vmem:[#allocation2 + $0x78] sm:$0xff] %vm364, %v460
        %518 = vst.msk [vmem:[#allocation2 + $0x80] sm:$0xff] %vm364, %v463
        %519 = vst.msk [vmem:[#allocation2 + $0x88] sm:$0xff] %vm364, %v465
        %520 = vst.msk [vmem:[#allocation2 + $0x90] sm:$0xff] %vm364, %v468
        %521 = vst.msk [vmem:[#allocation2 + $0x98] sm:$0xff] %vm364, %v470
        %522 = vst.msk [vmem:[#allocation2 + $0xa0] sm:$0xff] %vm364, %v473
        %523 = vst.msk [vmem:[#allocation2 + $0xa8] sm:$0xff] %vm364, %v475
        %524 = vst.msk [vmem:[#allocation2 + $0xb0] sm:$0xff] %vm364, %v478
        %525 = vst.msk [vmem:[#allocation2 + $0xb8] sm:$0xff] %vm364, %v480
        %526 = vst.msk [vmem:[#allocation2 + $0xc0] sm:$0xff] %vm364, %v483
        %527 = vst.msk [vmem:[#allocation2 + $0xc8] sm:$0xff] %vm364, %v485
        %528 = vst.msk [vmem:[#allocation2 + $0xd0] sm:$0xff] %vm364, %v488
        %529 = vst.msk [vmem:[#allocation2 + $0xd8] sm:$0xff] %vm364, %v490
        %530 = vst.msk [vmem:[#allocation2 + $0xe0] sm:$0xff] %vm364, %v493
        %531 = vst.msk [vmem:[#allocation2 + $0xe8] sm:$0xff] %vm364, %v495
        %532 = vst.msk [vmem:[#allocation2 + $0xf0] sm:$0xff] %vm364, %v498
        %533 = vst.msk [vmem:[#allocation2 + $0xf8] sm:$0xff] %vm364, %v500
      $region40: #{tpu_custom_call.1} parent=35 // pred_fallthru
        _
      %s534 = sadd.s32 %s21, 1
      %p535 = scmp.lt.s32.totalorder %s534, 2
      // Predicated region
      $region41: #{tpu_custom_call.1} parent=35 // pred_check
        %p536 = pneg %p535
      $region42: #{tpu_custom_call.1} parent=35 // pred_check_branch
        %538 = sbr.rel (%p536) target = $region44
      $region43: #{tpu_custom_call.1} parent=35 // pred_region
        %s539 = sand.u32 %s534, 1
        %s540 = sshrl.u32 %s534, 1
        %s541 = sand.u32 %s534, 1
        %s542 = smul.u32 %s540, 16
        %s543 = sadd.s32 %s541, %s542
        %s544 = smul.u32 %s20, 16
        %s545 = sadd.s32 %s543, %s544
        %s546 = scalar_lea.vmem %s0, %s545
        %s547 = sshrl.u32 %s539, 1
        %s548 = sand.u32 %s539, 1
        %s549 = smul.u32 %s547, 16
        %s550 = sadd.s32 %s548, %s549
        %s551 = smul.addr %s550, 128
        %s552 = scalar_lea.smem [#allocation3], %s551
        %s553 = scalar_lea.sflag [#allocation4], %s539
        %s554 = sshll.u32 %s546, 4
        %s555 = int_to_ptr.vmem [resolvable:$true] %s554
        %559 = dma.vmem_to_smem %s555, 128, %s552, %s553, 32, 32, 1
      $region44: #{tpu_custom_call.1} parent=35 // pred_fallthru
        _
      %s560 = scalar_lea.sflag [#allocation4], %s223
      %562 = dma.done %s560, 128
      %563 = sfence
      %s564 = smul.u32 %s21, 128
      %v565 = vld [vmem:[%s3] sm:$0x1]
      %v566 = vld [vmem:[%s4] sm:$0x1]
      loop: start=0, step=1, limit=16
      $region45: #{tpu_custom_call.1} parent=35 // loop_pre_header
        _
      $region46: #{tpu_custom_call.1} parent=35 // loop_header
        %s568 = sphi 0, %s572
        %p569 = scmp.ge.s32.totalorder %s568, 16
      $region47: #{tpu_custom_call.1} parent=35 // loop_header_branch
        %571 = sbr.rel (%p569) target = $region51
      $region48: #{tpu_custom_call.1} parent=35 // loop_body
        %s573 = smul.u32 %s568, 8
        %s574 = smul.u32 %s573, 8
        %s575 = sshra.s32 %s574, 7
        %s576 = sand.u32 %s574, 127
        %s577 = sshra.s32 %s223, 1
        %s578 = sand.u32 %s223, 1
        %s579 = smul.u32 %s577, 8
        %s580 = sadd.s32 %s575, %s579
        %s581 = smul.u32 %s580, 256
        %s582 = sshra.s32 %s223, 1
        %s583 = sand.u32 %s223, 1
        %s584 = sshra.s32 %s574, 7
        %s585 = sand.u32 %s574, 127
        %s586 = smul.u32 %s583, 128
        %s587 = sadd.s32 %s586, %s585
        %s588 = sadd.s32 %s581, %s587
        %s589 = sld [smem:[#allocation3 + %s588]]
        %s590 = scalar_lea.vmem [#allocation2], %s589
        %v591 = vld [vmem:[%s590] sm:$0x1]
        %s592 = sadd.s32 %s574, 1
        %s593 = sshra.s32 %s592, 7
        %s594 = sand.u32 %s592, 127
        %s595 = sadd.s32 %s593, %s579
        %s596 = smul.u32 %s595, 256
        %s597 = sshra.s32 %s592, 7
        %s598 = sand.u32 %s592, 127
        %s599 = sadd.s32 %s586, %s598
        %s600 = sadd.s32 %s596, %s599
        %s601 = sld [smem:[#allocation3 + %s600]]
        %s602 = scalar_lea.vmem [#allocation2], %s601
        %v603 = vld [vmem:[%s602] sm:$0x1]
        %s604 = sadd.s32 %s574, 2
        %s605 = sshra.s32 %s604, 7
        %s606 = sand.u32 %s604, 127
        %s607 = sadd.s32 %s605, %s579
        %s608 = smul.u32 %s607, 256
        %s609 = sshra.s32 %s604, 7
        %s610 = sand.u32 %s604, 127
        %s611 = sadd.s32 %s586, %s610
        %s612 = sadd.s32 %s608, %s611
        %s613 = sld [smem:[#allocation3 + %s612]]
        %s614 = scalar_lea.vmem [#allocation2], %s613
        %v615 = vld [vmem:[%s614] sm:$0x1]
        %s616 = sadd.s32 %s574, 3
        %s617 = sshra.s32 %s616, 7
        %s618 = sand.u32 %s616, 127
        %s619 = sadd.s32 %s617, %s579
        %s620 = smul.u32 %s619, 256
        %s621 = sshra.s32 %s616, 7
        %s622 = sand.u32 %s616, 127
        %s623 = sadd.s32 %s586, %s622
        %s624 = sadd.s32 %s620, %s623
        %s625 = sld [smem:[#allocation3 + %s624]]
        %s626 = scalar_lea.vmem [#allocation2], %s625
        %v627 = vld [vmem:[%s626] sm:$0x1]
        %s628 = sadd.s32 %s574, 4
        %s629 = sshra.s32 %s628, 7
        %s630 = sand.u32 %s628, 127
        %s631 = sadd.s32 %s629, %s579
        %s632 = smul.u32 %s631, 256
        %s633 = sshra.s32 %s628, 7
        %s634 = sand.u32 %s628, 127
        %s635 = sadd.s32 %s586, %s634
        %s636 = sadd.s32 %s632, %s635
        %s637 = sld [smem:[#allocation3 + %s636]]
        %s638 = scalar_lea.vmem [#allocation2], %s637
        %v639 = vld [vmem:[%s638] sm:$0x1]
        %s640 = sadd.s32 %s574, 5
        %s641 = sshra.s32 %s640, 7
        %s642 = sand.u32 %s640, 127
        %s643 = sadd.s32 %s641, %s579
        %s644 = smul.u32 %s643, 256
        %s645 = sshra.s32 %s640, 7
        %s646 = sand.u32 %s640, 127
        %s647 = sadd.s32 %s586, %s646
        %s648 = sadd.s32 %s644, %s647
        %s649 = sld [smem:[#allocation3 + %s648]]
        %s650 = scalar_lea.vmem [#allocation2], %s649
        %v651 = vld [vmem:[%s650] sm:$0x1]
        %s652 = sadd.s32 %s574, 6
        %s653 = sshra.s32 %s652, 7
        %s654 = sand.u32 %s652, 127
        %s655 = sadd.s32 %s653, %s579
        %s656 = smul.u32 %s655, 256
        %s657 = sshra.s32 %s652, 7
        %s658 = sand.u32 %s652, 127
        %s659 = sadd.s32 %s586, %s658
        %s660 = sadd.s32 %s656, %s659
        %s661 = sld [smem:[#allocation3 + %s660]]
        %s662 = scalar_lea.vmem [#allocation2], %s661
        %v663 = vld [vmem:[%s662] sm:$0x1]
        %s664 = sadd.s32 %s574, 7
        %s665 = sshra.s32 %s664, 7
        %s666 = sand.u32 %s664, 127
        %s667 = sadd.s32 %s665, %s579
        %s668 = smul.u32 %s667, 256
        %s669 = sshra.s32 %s664, 7
        %s670 = sand.u32 %s664, 127
        %s671 = sadd.s32 %s586, %s670
        %s672 = sadd.s32 %s668, %s671
        %s673 = sld [smem:[#allocation3 + %s672]]
        %s674 = scalar_lea.vmem [#allocation2], %s673
        %v675 = vld [vmem:[%s674] sm:$0x1]
        %v676 = vmax.f32 %v591, %v603
        %v677 = vmax.f32 %v615, %v627
        %v678 = vmax.f32 %v639, %v651
        %v679 = vmax.f32 %v663, %v675
        %v680 = vmax.f32 %v676, %v677
        %v681 = vmax.f32 %v678, %v679
        %v682 = vmax.f32 %v680, %v681
        %s683 = sadd.s32 %s574, 8
        %s684 = sshra.s32 %s683, 7
        %s685 = sand.u32 %s683, 127
        %s686 = sadd.s32 %s684, %s579
        %s687 = smul.u32 %s686, 256
        %s688 = sshra.s32 %s683, 7
        %s689 = sand.u32 %s683, 127
        %s690 = sadd.s32 %s586, %s689
        %s691 = sadd.s32 %s687, %s690
        %s692 = sld [smem:[#allocation3 + %s691]]
        %s693 = scalar_lea.vmem [#allocation2], %s692
        %v694 = vld [vmem:[%s693] sm:$0x1]
        %s695 = sadd.s32 %s574, 9
        %s696 = sshra.s32 %s695, 7
        %s697 = sand.u32 %s695, 127
        %s698 = sadd.s32 %s696, %s579
        %s699 = smul.u32 %s698, 256
        %s700 = sshra.s32 %s695, 7
        %s701 = sand.u32 %s695, 127
        %s702 = sadd.s32 %s586, %s701
        %s703 = sadd.s32 %s699, %s702
        %s704 = sld [smem:[#allocation3 + %s703]]
        %s705 = scalar_lea.vmem [#allocation2], %s704
        %v706 = vld [vmem:[%s705] sm:$0x1]
        %s707 = sadd.s32 %s574, 10
        %s708 = sshra.s32 %s707, 7
        %s709 = sand.u32 %s707, 127
        %s710 = sadd.s32 %s708, %s579
        %s711 = smul.u32 %s710, 256
        %s712 = sshra.s32 %s707, 7
        %s713 = sand.u32 %s707, 127
        %s714 = sadd.s32 %s586, %s713
        %s715 = sadd.s32 %s711, %s714
        %s716 = sld [smem:[#allocation3 + %s715]]
        %s717 = scalar_lea.vmem [#allocation2], %s716
        %v718 = vld [vmem:[%s717] sm:$0x1]
        %s719 = sadd.s32 %s574, 11
        %s720 = sshra.s32 %s719, 7
        %s721 = sand.u32 %s719, 127
        %s722 = sadd.s32 %s720, %s579
        %s723 = smul.u32 %s722, 256
        %s724 = sshra.s32 %s719, 7
        %s725 = sand.u32 %s719, 127
        %s726 = sadd.s32 %s586, %s725
        %s727 = sadd.s32 %s723, %s726
        %s728 = sld [smem:[#allocation3 + %s727]]
        %s729 = scalar_lea.vmem [#allocation2], %s728
        %v730 = vld [vmem:[%s729] sm:$0x1]
        %s731 = sadd.s32 %s574, 12
        %s732 = sshra.s32 %s731, 7
        %s733 = sand.u32 %s731, 127
        %s734 = sadd.s32 %s732, %s579
        %s735 = smul.u32 %s734, 256
        %s736 = sshra.s32 %s731, 7
        %s737 = sand.u32 %s731, 127
        %s738 = sadd.s32 %s586, %s737
        %s739 = sadd.s32 %s735, %s738
        %s740 = sld [smem:[#allocation3 + %s739]]
        %s741 = scalar_lea.vmem [#allocation2], %s740
        %v742 = vld [vmem:[%s741] sm:$0x1]
        %s743 = sadd.s32 %s574, 13
        %s744 = sshra.s32 %s743, 7
        %s745 = sand.u32 %s743, 127
        %s746 = sadd.s32 %s744, %s579
        %s747 = smul.u32 %s746, 256
        %s748 = sshra.s32 %s743, 7
        %s749 = sand.u32 %s743, 127
        %s750 = sadd.s32 %s586, %s749
        %s751 = sadd.s32 %s747, %s750
        %s752 = sld [smem:[#allocation3 + %s751]]
        %s753 = scalar_lea.vmem [#allocation2], %s752
        %v754 = vld [vmem:[%s753] sm:$0x1]
        %s755 = sadd.s32 %s574, 14
        %s756 = sshra.s32 %s755, 7
        %s757 = sand.u32 %s755, 127
        %s758 = sadd.s32 %s756, %s579
        %s759 = smul.u32 %s758, 256
        %s760 = sshra.s32 %s755, 7
        %s761 = sand.u32 %s755, 127
        %s762 = sadd.s32 %s586, %s761
        %s763 = sadd.s32 %s759, %s762
        %s764 = sld [smem:[#allocation3 + %s763]]
        %s765 = scalar_lea.vmem [#allocation2], %s764
        %v766 = vld [vmem:[%s765] sm:$0x1]
        %s767 = sadd.s32 %s574, 15
        %s768 = sshra.s32 %s767, 7
        %s769 = sand.u32 %s767, 127
        %s770 = sadd.s32 %s768, %s579
        %s771 = smul.u32 %s770, 256
        %s772 = sshra.s32 %s767, 7
        %s773 = sand.u32 %s767, 127
        %s774 = sadd.s32 %s586, %s773
        %s775 = sadd.s32 %s771, %s774
        %s776 = sld [smem:[#allocation3 + %s775]]
        %s777 = scalar_lea.vmem [#allocation2], %s776
        %v778 = vld [vmem:[%s777] sm:$0x1]
        %v779 = vmax.f32 %v694, %v706
        %v780 = vmax.f32 %v718, %v730
        %v781 = vmax.f32 %v742, %v754
        %v782 = vmax.f32 %v766, %v778
        %v783 = vmax.f32 %v779, %v780
        %v784 = vmax.f32 %v781, %v782
        %v785 = vmax.f32 %v783, %v784
        %s786 = sadd.s32 %s574, 16
        %s787 = sshra.s32 %s786, 7
        %s788 = sand.u32 %s786, 127
        %s789 = sadd.s32 %s787, %s579
        %s790 = smul.u32 %s789, 256
        %s791 = sshra.s32 %s786, 7
        %s792 = sand.u32 %s786, 127
        %s793 = sadd.s32 %s586, %s792
        %s794 = sadd.s32 %s790, %s793
        %s795 = sld [smem:[#allocation3 + %s794]]
        %s796 = scalar_lea.vmem [#allocation2], %s795
        %v797 = vld [vmem:[%s796] sm:$0x1]
        %s798 = sadd.s32 %s574, 17
        %s799 = sshra.s32 %s798, 7
        %s800 = sand.u32 %s798, 127
        %s801 = sadd.s32 %s799, %s579
        %s802 = smul.u32 %s801, 256
        %s803 = sshra.s32 %s798, 7
        %s804 = sand.u32 %s798, 127
        %s805 = sadd.s32 %s586, %s804
        %s806 = sadd.s32 %s802, %s805
        %s807 = sld [smem:[#allocation3 + %s806]]
        %s808 = scalar_lea.vmem [#allocation2], %s807
        %v809 = vld [vmem:[%s808] sm:$0x1]
        %s810 = sadd.s32 %s574, 18
        %s811 = sshra.s32 %s810, 7
        %s812 = sand.u32 %s810, 127
        %s813 = sadd.s32 %s811, %s579
        %s814 = smul.u32 %s813, 256
        %s815 = sshra.s32 %s810, 7
        %s816 = sand.u32 %s810, 127
        %s817 = sadd.s32 %s586, %s816
        %s818 = sadd.s32 %s814, %s817
        %s819 = sld [smem:[#allocation3 + %s818]]
        %s820 = scalar_lea.vmem [#allocation2], %s819
        %v821 = vld [vmem:[%s820] sm:$0x1]
        %s822 = sadd.s32 %s574, 19
        %s823 = sshra.s32 %s822, 7
        %s824 = sand.u32 %s822, 127
        %s825 = sadd.s32 %s823, %s579
        %s826 = smul.u32 %s825, 256
        %s827 = sshra.s32 %s822, 7
        %s828 = sand.u32 %s822, 127
        %s829 = sadd.s32 %s586, %s828
        %s830 = sadd.s32 %s826, %s829
        %s831 = sld [smem:[#allocation3 + %s830]]
        %s832 = scalar_lea.vmem [#allocation2], %s831
        %v833 = vld [vmem:[%s832] sm:$0x1]
        %s834 = sadd.s32 %s574, 20
        %s835 = sshra.s32 %s834, 7
        %s836 = sand.u32 %s834, 127
        %s837 = sadd.s32 %s835, %s579
        %s838 = smul.u32 %s837, 256
        %s839 = sshra.s32 %s834, 7
        %s840 = sand.u32 %s834, 127
        %s841 = sadd.s32 %s586, %s840
        %s842 = sadd.s32 %s838, %s841
        %s843 = sld [smem:[#allocation3 + %s842]]
        %s844 = scalar_lea.vmem [#allocation2], %s843
        %v845 = vld [vmem:[%s844] sm:$0x1]
        %s846 = sadd.s32 %s574, 21
        %s847 = sshra.s32 %s846, 7
        %s848 = sand.u32 %s846, 127
        %s849 = sadd.s32 %s847, %s579
        %s850 = smul.u32 %s849, 256
        %s851 = sshra.s32 %s846, 7
        %s852 = sand.u32 %s846, 127
        %s853 = sadd.s32 %s586, %s852
        %s854 = sadd.s32 %s850, %s853
        %s855 = sld [smem:[#allocation3 + %s854]]
        %s856 = scalar_lea.vmem [#allocation2], %s855
        %v857 = vld [vmem:[%s856] sm:$0x1]
        %s858 = sadd.s32 %s574, 22
        %s859 = sshra.s32 %s858, 7
        %s860 = sand.u32 %s858, 127
        %s861 = sadd.s32 %s859, %s579
        %s862 = smul.u32 %s861, 256
        %s863 = sshra.s32 %s858, 7
        %s864 = sand.u32 %s858, 127
        %s865 = sadd.s32 %s586, %s864
        %s866 = sadd.s32 %s862, %s865
        %s867 = sld [smem:[#allocation3 + %s866]]
        %s868 = scalar_lea.vmem [#allocation2], %s867
        %v869 = vld [vmem:[%s868] sm:$0x1]
        %s870 = sadd.s32 %s574, 23
        %s871 = sshra.s32 %s870, 7
        %s872 = sand.u32 %s870, 127
        %s873 = sadd.s32 %s871, %s579
        %s874 = smul.u32 %s873, 256
        %s875 = sshra.s32 %s870, 7
        %s876 = sand.u32 %s870, 127
        %s877 = sadd.s32 %s586, %s876
        %s878 = sadd.s32 %s874, %s877
        %s879 = sld [smem:[#allocation3 + %s878]]
        %s880 = scalar_lea.vmem [#allocation2], %s879
        %v881 = vld [vmem:[%s880] sm:$0x1]
        %v882 = vmax.f32 %v797, %v809
        %v883 = vmax.f32 %v821, %v833
        %v884 = vmax.f32 %v845, %v857
        %v885 = vmax.f32 %v869, %v881
        %v886 = vmax.f32 %v882, %v883
        %v887 = vmax.f32 %v884, %v885
        %v888 = vmax.f32 %v886, %v887
        %s889 = sadd.s32 %s574, 24
        %s890 = sshra.s32 %s889, 7
        %s891 = sand.u32 %s889, 127
        %s892 = sadd.s32 %s890, %s579
        %s893 = smul.u32 %s892, 256
        %s894 = sshra.s32 %s889, 7
        %s895 = sand.u32 %s889, 127
        %s896 = sadd.s32 %s586, %s895
        %s897 = sadd.s32 %s893, %s896
        %s898 = sld [smem:[#allocation3 + %s897]]
        %s899 = scalar_lea.vmem [#allocation2], %s898
        %v900 = vld [vmem:[%s899] sm:$0x1]
        %s901 = sadd.s32 %s574, 25
        %s902 = sshra.s32 %s901, 7
        %s903 = sand.u32 %s901, 127
        %s904 = sadd.s32 %s902, %s579
        %s905 = smul.u32 %s904, 256
        %s906 = sshra.s32 %s901, 7
        %s907 = sand.u32 %s901, 127
        %s908 = sadd.s32 %s586, %s907
        %s909 = sadd.s32 %s905, %s908
        %s910 = sld [smem:[#allocation3 + %s909]]
        %s911 = scalar_lea.vmem [#allocation2], %s910
        %v912 = vld [vmem:[%s911] sm:$0x1]
        %s913 = sadd.s32 %s574, 26
        %s914 = sshra.s32 %s913, 7
        %s915 = sand.u32 %s913, 127
        %s916 = sadd.s32 %s914, %s579
        %s917 = smul.u32 %s916, 256
        %s918 = sshra.s32 %s913, 7
        %s919 = sand.u32 %s913, 127
        %s920 = sadd.s32 %s586, %s919
        %s921 = sadd.s32 %s917, %s920
        %s922 = sld [smem:[#allocation3 + %s921]]
        %s923 = scalar_lea.vmem [#allocation2], %s922
        %v924 = vld [vmem:[%s923] sm:$0x1]
        %s925 = sadd.s32 %s574, 27
        %s926 = sshra.s32 %s925, 7
        %s927 = sand.u32 %s925, 127
        %s928 = sadd.s32 %s926, %s579
        %s929 = smul.u32 %s928, 256
        %s930 = sshra.s32 %s925, 7
        %s931 = sand.u32 %s925, 127
        %s932 = sadd.s32 %s586, %s931
        %s933 = sadd.s32 %s929, %s932
        %s934 = sld [smem:[#allocation3 + %s933]]
        %s935 = scalar_lea.vmem [#allocation2], %s934
        %v936 = vld [vmem:[%s935] sm:$0x1]
        %s937 = sadd.s32 %s574, 28
        %s938 = sshra.s32 %s937, 7
        %s939 = sand.u32 %s937, 127
        %s940 = sadd.s32 %s938, %s579
        %s941 = smul.u32 %s940, 256
        %s942 = sshra.s32 %s937, 7
        %s943 = sand.u32 %s937, 127
        %s944 = sadd.s32 %s586, %s943
        %s945 = sadd.s32 %s941, %s944
        %s946 = sld [smem:[#allocation3 + %s945]]
        %s947 = scalar_lea.vmem [#allocation2], %s946
        %v948 = vld [vmem:[%s947] sm:$0x1]
        %s949 = sadd.s32 %s574, 29
        %s950 = sshra.s32 %s949, 7
        %s951 = sand.u32 %s949, 127
        %s952 = sadd.s32 %s950, %s579
        %s953 = smul.u32 %s952, 256
        %s954 = sshra.s32 %s949, 7
        %s955 = sand.u32 %s949, 127
        %s956 = sadd.s32 %s586, %s955
        %s957 = sadd.s32 %s953, %s956
        %s958 = sld [smem:[#allocation3 + %s957]]
        %s959 = scalar_lea.vmem [#allocation2], %s958
        %v960 = vld [vmem:[%s959] sm:$0x1]
        %s961 = sadd.s32 %s574, 30
        %s962 = sshra.s32 %s961, 7
        %s963 = sand.u32 %s961, 127
        %s964 = sadd.s32 %s962, %s579
        %s965 = smul.u32 %s964, 256
        %s966 = sshra.s32 %s961, 7
        %s967 = sand.u32 %s961, 127
        %s968 = sadd.s32 %s586, %s967
        %s969 = sadd.s32 %s965, %s968
        %s970 = sld [smem:[#allocation3 + %s969]]
        %s971 = scalar_lea.vmem [#allocation2], %s970
        %v972 = vld [vmem:[%s971] sm:$0x1]
        %s973 = sadd.s32 %s574, 31
        %s974 = sshra.s32 %s973, 7
        %s975 = sand.u32 %s973, 127
        %s976 = sadd.s32 %s974, %s579
        %s977 = smul.u32 %s976, 256
        %s978 = sshra.s32 %s973, 7
        %s979 = sand.u32 %s973, 127
        %s980 = sadd.s32 %s586, %s979
        %s981 = sadd.s32 %s977, %s980
        %s982 = sld [smem:[#allocation3 + %s981]]
        %s983 = scalar_lea.vmem [#allocation2], %s982
        %v984 = vld [vmem:[%s983] sm:$0x1]
        %v985 = vmax.f32 %v900, %v912
        %v986 = vmax.f32 %v924, %v936
        %v987 = vmax.f32 %v948, %v960
        %v988 = vmax.f32 %v972, %v984
        %v989 = vmax.f32 %v985, %v986
        %v990 = vmax.f32 %v987, %v988
        %v991 = vmax.f32 %v989, %v990
        %s992 = sadd.s32 %s574, 32
        %s993 = sshra.s32 %s992, 7
        %s994 = sand.u32 %s992, 127
        %s995 = sadd.s32 %s993, %s579
        %s996 = smul.u32 %s995, 256
        %s997 = sshra.s32 %s992, 7
        %s998 = sand.u32 %s992, 127
        %s999 = sadd.s32 %s586, %s998
        %s1000 = sadd.s32 %s996, %s999
        %s1001 = sld [smem:[#allocation3 + %s1000]]
        %s1002 = scalar_lea.vmem [#allocation2], %s1001
        %v1003 = vld [vmem:[%s1002] sm:$0x1]
        %s1004 = sadd.s32 %s574, 33
        %s1005 = sshra.s32 %s1004, 7
        %s1006 = sand.u32 %s1004, 127
        %s1007 = sadd.s32 %s1005, %s579
        %s1008 = smul.u32 %s1007, 256
        %s1009 = sshra.s32 %s1004, 7
        %s1010 = sand.u32 %s1004, 127
        %s1011 = sadd.s32 %s586, %s1010
        %s1012 = sadd.s32 %s1008, %s1011
        %s1013 = sld [smem:[#allocation3 + %s1012]]
        %s1014 = scalar_lea.vmem [#allocation2], %s1013
        %v1015 = vld [vmem:[%s1014] sm:$0x1]
        %s1016 = sadd.s32 %s574, 34
        %s1017 = sshra.s32 %s1016, 7
        %s1018 = sand.u32 %s1016, 127
        %s1019 = sadd.s32 %s1017, %s579
        %s1020 = smul.u32 %s1019, 256
        %s1021 = sshra.s32 %s1016, 7
        %s1022 = sand.u32 %s1016, 127
        %s1023 = sadd.s32 %s586, %s1022
        %s1024 = sadd.s32 %s1020, %s1023
        %s1025 = sld [smem:[#allocation3 + %s1024]]
        %s1026 = scalar_lea.vmem [#allocation2], %s1025
        %v1027 = vld [vmem:[%s1026] sm:$0x1]
        %s1028 = sadd.s32 %s574, 35
        %s1029 = sshra.s32 %s1028, 7
        %s1030 = sand.u32 %s1028, 127
        %s1031 = sadd.s32 %s1029, %s579
        %s1032 = smul.u32 %s1031, 256
        %s1033 = sshra.s32 %s1028, 7
        %s1034 = sand.u32 %s1028, 127
        %s1035 = sadd.s32 %s586, %s1034
        %s1036 = sadd.s32 %s1032, %s1035
        %s1037 = sld [smem:[#allocation3 + %s1036]]
        %s1038 = scalar_lea.vmem [#allocation2], %s1037
        %v1039 = vld [vmem:[%s1038] sm:$0x1]
        %s1040 = sadd.s32 %s574, 36
        %s1041 = sshra.s32 %s1040, 7
        %s1042 = sand.u32 %s1040, 127
        %s1043 = sadd.s32 %s1041, %s579
        %s1044 = smul.u32 %s1043, 256
        %s1045 = sshra.s32 %s1040, 7
        %s1046 = sand.u32 %s1040, 127
        %s1047 = sadd.s32 %s586, %s1046
        %s1048 = sadd.s32 %s1044, %s1047
        %s1049 = sld [smem:[#allocation3 + %s1048]]
        %s1050 = scalar_lea.vmem [#allocation2], %s1049
        %v1051 = vld [vmem:[%s1050] sm:$0x1]
        %s1052 = sadd.s32 %s574, 37
        %s1053 = sshra.s32 %s1052, 7
        %s1054 = sand.u32 %s1052, 127
        %s1055 = sadd.s32 %s1053, %s579
        %s1056 = smul.u32 %s1055, 256
        %s1057 = sshra.s32 %s1052, 7
        %s1058 = sand.u32 %s1052, 127
        %s1059 = sadd.s32 %s586, %s1058
        %s1060 = sadd.s32 %s1056, %s1059
        %s1061 = sld [smem:[#allocation3 + %s1060]]
        %s1062 = scalar_lea.vmem [#allocation2], %s1061
        %v1063 = vld [vmem:[%s1062] sm:$0x1]
        %s1064 = sadd.s32 %s574, 38
        %s1065 = sshra.s32 %s1064, 7
        %s1066 = sand.u32 %s1064, 127
        %s1067 = sadd.s32 %s1065, %s579
        %s1068 = smul.u32 %s1067, 256
        %s1069 = sshra.s32 %s1064, 7
        %s1070 = sand.u32 %s1064, 127
        %s1071 = sadd.s32 %s586, %s1070
        %s1072 = sadd.s32 %s1068, %s1071
        %s1073 = sld [smem:[#allocation3 + %s1072]]
        %s1074 = scalar_lea.vmem [#allocation2], %s1073
        %v1075 = vld [vmem:[%s1074] sm:$0x1]
        %s1076 = sadd.s32 %s574, 39
        %s1077 = sshra.s32 %s1076, 7
        %s1078 = sand.u32 %s1076, 127
        %s1079 = sadd.s32 %s1077, %s579
        %s1080 = smul.u32 %s1079, 256
        %s1081 = sshra.s32 %s1076, 7
        %s1082 = sand.u32 %s1076, 127
        %s1083 = sadd.s32 %s586, %s1082
        %s1084 = sadd.s32 %s1080, %s1083
        %s1085 = sld [smem:[#allocation3 + %s1084]]
        %s1086 = scalar_lea.vmem [#allocation2], %s1085
        %v1087 = vld [vmem:[%s1086] sm:$0x1]
        %v1088 = vmax.f32 %v1003, %v1015
        %v1089 = vmax.f32 %v1027, %v1039
        %v1090 = vmax.f32 %v1051, %v1063
        %v1091 = vmax.f32 %v1075, %v1087
        %v1092 = vmax.f32 %v1088, %v1089
        %v1093 = vmax.f32 %v1090, %v1091
        %v1094 = vmax.f32 %v1092, %v1093
        %s1095 = sadd.s32 %s574, 40
        %s1096 = sshra.s32 %s1095, 7
        %s1097 = sand.u32 %s1095, 127
        %s1098 = sadd.s32 %s1096, %s579
        %s1099 = smul.u32 %s1098, 256
        %s1100 = sshra.s32 %s1095, 7
        %s1101 = sand.u32 %s1095, 127
        %s1102 = sadd.s32 %s586, %s1101
        %s1103 = sadd.s32 %s1099, %s1102
        %s1104 = sld [smem:[#allocation3 + %s1103]]
        %s1105 = scalar_lea.vmem [#allocation2], %s1104
        %v1106 = vld [vmem:[%s1105] sm:$0x1]
        %s1107 = sadd.s32 %s574, 41
        %s1108 = sshra.s32 %s1107, 7
        %s1109 = sand.u32 %s1107, 127
        %s1110 = sadd.s32 %s1108, %s579
        %s1111 = smul.u32 %s1110, 256
        %s1112 = sshra.s32 %s1107, 7
        %s1113 = sand.u32 %s1107, 127
        %s1114 = sadd.s32 %s586, %s1113
        %s1115 = sadd.s32 %s1111, %s1114
        %s1116 = sld [smem:[#allocation3 + %s1115]]
        %s1117 = scalar_lea.vmem [#allocation2], %s1116
        %v1118 = vld [vmem:[%s1117] sm:$0x1]
        %s1119 = sadd.s32 %s574, 42
        %s1120 = sshra.s32 %s1119, 7
        %s1121 = sand.u32 %s1119, 127
        %s1122 = sadd.s32 %s1120, %s579
        %s1123 = smul.u32 %s1122, 256
        %s1124 = sshra.s32 %s1119, 7
        %s1125 = sand.u32 %s1119, 127
        %s1126 = sadd.s32 %s586, %s1125
        %s1127 = sadd.s32 %s1123, %s1126
        %s1128 = sld [smem:[#allocation3 + %s1127]]
        %s1129 = scalar_lea.vmem [#allocation2], %s1128
        %v1130 = vld [vmem:[%s1129] sm:$0x1]
        %s1131 = sadd.s32 %s574, 43
        %s1132 = sshra.s32 %s1131, 7
        %s1133 = sand.u32 %s1131, 127
        %s1134 = sadd.s32 %s1132, %s579
        %s1135 = smul.u32 %s1134, 256
        %s1136 = sshra.s32 %s1131, 7
        %s1137 = sand.u32 %s1131, 127
        %s1138 = sadd.s32 %s586, %s1137
        %s1139 = sadd.s32 %s1135, %s1138
        %s1140 = sld [smem:[#allocation3 + %s1139]]
        %s1141 = scalar_lea.vmem [#allocation2], %s1140
        %v1142 = vld [vmem:[%s1141] sm:$0x1]
        %s1143 = sadd.s32 %s574, 44
        %s1144 = sshra.s32 %s1143, 7
        %s1145 = sand.u32 %s1143, 127
        %s1146 = sadd.s32 %s1144, %s579
        %s1147 = smul.u32 %s1146, 256
        %s1148 = sshra.s32 %s1143, 7
        %s1149 = sand.u32 %s1143, 127
        %s1150 = sadd.s32 %s586, %s1149
        %s1151 = sadd.s32 %s1147, %s1150
        %s1152 = sld [smem:[#allocation3 + %s1151]]
        %s1153 = scalar_lea.vmem [#allocation2], %s1152
        %v1154 = vld [vmem:[%s1153] sm:$0x1]
        %s1155 = sadd.s32 %s574, 45
        %s1156 = sshra.s32 %s1155, 7
        %s1157 = sand.u32 %s1155, 127
        %s1158 = sadd.s32 %s1156, %s579
        %s1159 = smul.u32 %s1158, 256
        %s1160 = sshra.s32 %s1155, 7
        %s1161 = sand.u32 %s1155, 127
        %s1162 = sadd.s32 %s586, %s1161
        %s1163 = sadd.s32 %s1159, %s1162
        %s1164 = sld [smem:[#allocation3 + %s1163]]
        %s1165 = scalar_lea.vmem [#allocation2], %s1164
        %v1166 = vld [vmem:[%s1165] sm:$0x1]
        %s1167 = sadd.s32 %s574, 46
        %s1168 = sshra.s32 %s1167, 7
        %s1169 = sand.u32 %s1167, 127
        %s1170 = sadd.s32 %s1168, %s579
        %s1171 = smul.u32 %s1170, 256
        %s1172 = sshra.s32 %s1167, 7
        %s1173 = sand.u32 %s1167, 127
        %s1174 = sadd.s32 %s586, %s1173
        %s1175 = sadd.s32 %s1171, %s1174
        %s1176 = sld [smem:[#allocation3 + %s1175]]
        %s1177 = scalar_lea.vmem [#allocation2], %s1176
        %v1178 = vld [vmem:[%s1177] sm:$0x1]
        %s1179 = sadd.s32 %s574, 47
        %s1180 = sshra.s32 %s1179, 7
        %s1181 = sand.u32 %s1179, 127
        %s1182 = sadd.s32 %s1180, %s579
        %s1183 = smul.u32 %s1182, 256
        %s1184 = sshra.s32 %s1179, 7
        %s1185 = sand.u32 %s1179, 127
        %s1186 = sadd.s32 %s586, %s1185
        %s1187 = sadd.s32 %s1183, %s1186
        %s1188 = sld [smem:[#allocation3 + %s1187]]
        %s1189 = scalar_lea.vmem [#allocation2], %s1188
        %v1190 = vld [vmem:[%s1189] sm:$0x1]
        %v1191 = vmax.f32 %v1106, %v1118
        %v1192 = vmax.f32 %v1130, %v1142
        %v1193 = vmax.f32 %v1154, %v1166
        %v1194 = vmax.f32 %v1178, %v1190
        %v1195 = vmax.f32 %v1191, %v1192
        %v1196 = vmax.f32 %v1193, %v1194
        %v1197 = vmax.f32 %v1195, %v1196
        %s1198 = sadd.s32 %s574, 48
        %s1199 = sshra.s32 %s1198, 7
        %s1200 = sand.u32 %s1198, 127
        %s1201 = sadd.s32 %s1199, %s579
        %s1202 = smul.u32 %s1201, 256
        %s1203 = sshra.s32 %s1198, 7
        %s1204 = sand.u32 %s1198, 127
        %s1205 = sadd.s32 %s586, %s1204
        %s1206 = sadd.s32 %s1202, %s1205
        %s1207 = sld [smem:[#allocation3 + %s1206]]
        %s1208 = scalar_lea.vmem [#allocation2], %s1207
        %v1209 = vld [vmem:[%s1208] sm:$0x1]
        %s1210 = sadd.s32 %s574, 49
        %s1211 = sshra.s32 %s1210, 7
        %s1212 = sand.u32 %s1210, 127
        %s1213 = sadd.s32 %s1211, %s579
        %s1214 = smul.u32 %s1213, 256
        %s1215 = sshra.s32 %s1210, 7
        %s1216 = sand.u32 %s1210, 127
        %s1217 = sadd.s32 %s586, %s1216
        %s1218 = sadd.s32 %s1214, %s1217
        %s1219 = sld [smem:[#allocation3 + %s1218]]
        %s1220 = scalar_lea.vmem [#allocation2], %s1219
        %v1221 = vld [vmem:[%s1220] sm:$0x1]
        %s1222 = sadd.s32 %s574, 50
        %s1223 = sshra.s32 %s1222, 7
        %s1224 = sand.u32 %s1222, 127
        %s1225 = sadd.s32 %s1223, %s579
        %s1226 = smul.u32 %s1225, 256
        %s1227 = sshra.s32 %s1222, 7
        %s1228 = sand.u32 %s1222, 127
        %s1229 = sadd.s32 %s586, %s1228
        %s1230 = sadd.s32 %s1226, %s1229
        %s1231 = sld [smem:[#allocation3 + %s1230]]
        %s1232 = scalar_lea.vmem [#allocation2], %s1231
        %v1233 = vld [vmem:[%s1232] sm:$0x1]
        %s1234 = sadd.s32 %s574, 51
        %s1235 = sshra.s32 %s1234, 7
        %s1236 = sand.u32 %s1234, 127
        %s1237 = sadd.s32 %s1235, %s579
        %s1238 = smul.u32 %s1237, 256
        %s1239 = sshra.s32 %s1234, 7
        %s1240 = sand.u32 %s1234, 127
        %s1241 = sadd.s32 %s586, %s1240
        %s1242 = sadd.s32 %s1238, %s1241
        %s1243 = sld [smem:[#allocation3 + %s1242]]
        %s1244 = scalar_lea.vmem [#allocation2], %s1243
        %v1245 = vld [vmem:[%s1244] sm:$0x1]
        %s1246 = sadd.s32 %s574, 52
        %s1247 = sshra.s32 %s1246, 7
        %s1248 = sand.u32 %s1246, 127
        %s1249 = sadd.s32 %s1247, %s579
        %s1250 = smul.u32 %s1249, 256
        %s1251 = sshra.s32 %s1246, 7
        %s1252 = sand.u32 %s1246, 127
        %s1253 = sadd.s32 %s586, %s1252
        %s1254 = sadd.s32 %s1250, %s1253
        %s1255 = sld [smem:[#allocation3 + %s1254]]
        %s1256 = scalar_lea.vmem [#allocation2], %s1255
        %v1257 = vld [vmem:[%s1256] sm:$0x1]
        %s1258 = sadd.s32 %s574, 53
        %s1259 = sshra.s32 %s1258, 7
        %s1260 = sand.u32 %s1258, 127
        %s1261 = sadd.s32 %s1259, %s579
        %s1262 = smul.u32 %s1261, 256
        %s1263 = sshra.s32 %s1258, 7
        %s1264 = sand.u32 %s1258, 127
        %s1265 = sadd.s32 %s586, %s1264
        %s1266 = sadd.s32 %s1262, %s1265
        %s1267 = sld [smem:[#allocation3 + %s1266]]
        %s1268 = scalar_lea.vmem [#allocation2], %s1267
        %v1269 = vld [vmem:[%s1268] sm:$0x1]
        %s1270 = sadd.s32 %s574, 54
        %s1271 = sshra.s32 %s1270, 7
        %s1272 = sand.u32 %s1270, 127
        %s1273 = sadd.s32 %s1271, %s579
        %s1274 = smul.u32 %s1273, 256
        %s1275 = sshra.s32 %s1270, 7
        %s1276 = sand.u32 %s1270, 127
        %s1277 = sadd.s32 %s586, %s1276
        %s1278 = sadd.s32 %s1274, %s1277
        %s1279 = sld [smem:[#allocation3 + %s1278]]
        %s1280 = scalar_lea.vmem [#allocation2], %s1279
        %v1281 = vld [vmem:[%s1280] sm:$0x1]
        %s1282 = sadd.s32 %s574, 55
        %s1283 = sshra.s32 %s1282, 7
        %s1284 = sand.u32 %s1282, 127
        %s1285 = sadd.s32 %s1283, %s579
        %s1286 = smul.u32 %s1285, 256
        %s1287 = sshra.s32 %s1282, 7
        %s1288 = sand.u32 %s1282, 127
        %s1289 = sadd.s32 %s586, %s1288
        %s1290 = sadd.s32 %s1286, %s1289
        %s1291 = sld [smem:[#allocation3 + %s1290]]
        %s1292 = scalar_lea.vmem [#allocation2], %s1291
        %v1293 = vld [vmem:[%s1292] sm:$0x1]
        %v1294 = vmax.f32 %v1209, %v1221
        %v1295 = vmax.f32 %v1233, %v1245
        %v1296 = vmax.f32 %v1257, %v1269
        %v1297 = vmax.f32 %v1281, %v1293
        %v1298 = vmax.f32 %v1294, %v1295
        %v1299 = vmax.f32 %v1296, %v1297
        %v1300 = vmax.f32 %v1298, %v1299
        %s1301 = sadd.s32 %s574, 56
        %s1302 = sshra.s32 %s1301, 7
        %s1303 = sand.u32 %s1301, 127
        %s1304 = sadd.s32 %s1302, %s579
        %s1305 = smul.u32 %s1304, 256
        %s1306 = sshra.s32 %s1301, 7
        %s1307 = sand.u32 %s1301, 127
        %s1308 = sadd.s32 %s586, %s1307
        %s1309 = sadd.s32 %s1305, %s1308
        %s1310 = sld [smem:[#allocation3 + %s1309]]
        %s1311 = scalar_lea.vmem [#allocation2], %s1310
        %v1312 = vld [vmem:[%s1311] sm:$0x1]
        %s1313 = sadd.s32 %s574, 57
        %s1314 = sshra.s32 %s1313, 7
        %s1315 = sand.u32 %s1313, 127
        %s1316 = sadd.s32 %s1314, %s579
        %s1317 = smul.u32 %s1316, 256
        %s1318 = sshra.s32 %s1313, 7
        %s1319 = sand.u32 %s1313, 127
        %s1320 = sadd.s32 %s586, %s1319
        %s1321 = sadd.s32 %s1317, %s1320
        %s1322 = sld [smem:[#allocation3 + %s1321]]
        %s1323 = scalar_lea.vmem [#allocation2], %s1322
        %v1324 = vld [vmem:[%s1323] sm:$0x1]
        %s1325 = sadd.s32 %s574, 58
        %s1326 = sshra.s32 %s1325, 7
        %s1327 = sand.u32 %s1325, 127
        %s1328 = sadd.s32 %s1326, %s579
        %s1329 = smul.u32 %s1328, 256
        %s1330 = sshra.s32 %s1325, 7
        %s1331 = sand.u32 %s1325, 127
        %s1332 = sadd.s32 %s586, %s1331
        %s1333 = sadd.s32 %s1329, %s1332
        %s1334 = sld [smem:[#allocation3 + %s1333]]
        %s1335 = scalar_lea.vmem [#allocation2], %s1334
        %v1336 = vld [vmem:[%s1335] sm:$0x1]
        %s1337 = sadd.s32 %s574, 59
        %s1338 = sshra.s32 %s1337, 7
        %s1339 = sand.u32 %s1337, 127
        %s1340 = sadd.s32 %s1338, %s579
        %s1341 = smul.u32 %s1340, 256
        %s1342 = sshra.s32 %s1337, 7
        %s1343 = sand.u32 %s1337, 127
        %s1344 = sadd.s32 %s586, %s1343
        %s1345 = sadd.s32 %s1341, %s1344
        %s1346 = sld [smem:[#allocation3 + %s1345]]
        %s1347 = scalar_lea.vmem [#allocation2], %s1346
        %v1348 = vld [vmem:[%s1347] sm:$0x1]
        %s1349 = sadd.s32 %s574, 60
        %s1350 = sshra.s32 %s1349, 7
        %s1351 = sand.u32 %s1349, 127
        %s1352 = sadd.s32 %s1350, %s579
        %s1353 = smul.u32 %s1352, 256
        %s1354 = sshra.s32 %s1349, 7
        %s1355 = sand.u32 %s1349, 127
        %s1356 = sadd.s32 %s586, %s1355
        %s1357 = sadd.s32 %s1353, %s1356
        %s1358 = sld [smem:[#allocation3 + %s1357]]
        %s1359 = scalar_lea.vmem [#allocation2], %s1358
        %v1360 = vld [vmem:[%s1359] sm:$0x1]
        %s1361 = sadd.s32 %s574, 61
        %s1362 = sshra.s32 %s1361, 7
        %s1363 = sand.u32 %s1361, 127
        %s1364 = sadd.s32 %s1362, %s579
        %s1365 = smul.u32 %s1364, 256
        %s1366 = sshra.s32 %s1361, 7
        %s1367 = sand.u32 %s1361, 127
        %s1368 = sadd.s32 %s586, %s1367
        %s1369 = sadd.s32 %s1365, %s1368
        %s1370 = sld [smem:[#allocation3 + %s1369]]
        %s1371 = scalar_lea.vmem [#allocation2], %s1370
        %v1372 = vld [vmem:[%s1371] sm:$0x1]
        %s1373 = sadd.s32 %s574, 62
        %s1374 = sshra.s32 %s1373, 7
        %s1375 = sand.u32 %s1373, 127
        %s1376 = sadd.s32 %s1374, %s579
        %s1377 = smul.u32 %s1376, 256
        %s1378 = sshra.s32 %s1373, 7
        %s1379 = sand.u32 %s1373, 127
        %s1380 = sadd.s32 %s586, %s1379
        %s1381 = sadd.s32 %s1377, %s1380
        %s1382 = sld [smem:[#allocation3 + %s1381]]
        %s1383 = scalar_lea.vmem [#allocation2], %s1382
        %v1384 = vld [vmem:[%s1383] sm:$0x1]
        %s1385 = sadd.s32 %s574, 63
        %s1386 = sshra.s32 %s1385, 7
        %s1387 = sand.u32 %s1385, 127
        %s1388 = sadd.s32 %s1386, %s579
        %s1389 = smul.u32 %s1388, 256
        %s1390 = sshra.s32 %s1385, 7
        %s1391 = sand.u32 %s1385, 127
        %s1392 = sadd.s32 %s586, %s1391
        %s1393 = sadd.s32 %s1389, %s1392
        %s1394 = sld [smem:[#allocation3 + %s1393]]
        %s1395 = scalar_lea.vmem [#allocation2], %s1394
        %v1396 = vld [vmem:[%s1395] sm:$0x1]
        %v1397 = vmax.f32 %v1312, %v1324
        %v1398 = vmax.f32 %v1336, %v1348
        %v1399 = vmax.f32 %v1360, %v1372
        %v1400 = vmax.f32 %v1384, %v1396
        %v1401 = vmax.f32 %v1397, %v1398
        %v1402 = vmax.f32 %v1399, %v1400
        %v1403 = vmax.f32 %v1401, %v1402
        %v1405 = vrot.slane %v785, 7
        %v1408 = vrot.slane %v888, 6
        %v1411 = vrot.slane %v991, 5
        %v1414 = vrot.slane %v1094, 4
        %v1417 = vrot.slane %v1197, 3
        %v1420 = vrot.slane %v1300, 2
        %v1423 = vrot.slane %v1403, 1
        %vm1425 = vcmask 1040384
        %v1426 = vsel %vm1425, %v682, %v1405
        %vm1427 = vcmask 1041408
        %v1428 = vsel %vm1427, %v1426, %v1408
        %vm1429 = vcmask 1042432
        %v1430 = vsel %vm1429, %v1428, %v1411
        %vm1431 = vcmask 1043456
        %v1432 = vsel %vm1431, %v1430, %v1414
        %vm1433 = vcmask 1044480
        %v1434 = vsel %vm1433, %v1432, %v1417
        %vm1435 = vcmask 1045504
        %v1436 = vsel %vm1435, %v1434, %v1420
        %vm1437 = vcmask 1046528
        %v1438 = vsel %vm1437, %v1436, %v1423
        %s1439 = sadd.s32 %s564, %s573
        %s1440 = scalar_lea.vmem [#allocation2], %s1439
        %v1441 = vld [vmem:[%s1440] sm:$0xff]
        %v1442 = vsub.f32 %v1438, %v1441
        %v1444 = vperm.slane %v565, 0
        %v1446 = vmul.f32 %v1442, %v1444
        %v1448 = vperm.slane %v566, 0
        %v1450 = vadd.f32 %v1446, %v1448
        %s1451 = scalar_lea.vmem %s220, %s573
        %vm1452 = vcmask 261120
        %1453 = vst.msk [vmem:[%s1451] sm:$0xff] %vm1452, %v1450
      $region49: #{tpu_custom_call.1} parent=35 // loop_footer
        %s572 = sadd.s32 1, %s568
      $region50: #{tpu_custom_call.1} parent=35 // loop_footer_branch
        %567 = sbr.rel target = $region46
      $region51: #{tpu_custom_call.1} parent=35 // loop_exit
        _
      %s1454 = smul.u32 16, %s21
      %p1455 = scmp.lt.s32.totalorder %s20, 1
      %s1456 = scalar_select %p1455, %s20, 1
      %p1457 = scmp.lt.s32.totalorder %s1454, 31
      %s1458 = scalar_select %p1457, %s1454, 31
      %s1459 = smul.addr %s1456, 32
      %s1460 = sadd.s32 %s1458, %s1459
      %s1461 = smul.addr %s1460, 8
      %s1462 = scalar_lea.vmem %s5, %s1461
      // Predicated region
      $region52: #{tpu_custom_call.1} parent=35 // pred_check
        %p1463 = pneg %p137
      $region53: #{tpu_custom_call.1} parent=35 // pred_check_branch
        %1465 = sbr.rel (%p1463) target = $region55
      $region54: #{tpu_custom_call.1} parent=35 // pred_region
        %s1466 = smul.u32 16, %s21
      $region55: #{tpu_custom_call.1} parent=35 // pred_fallthru
        _
    $region36: #{tpu_custom_call.1} parent=5 // pred_fallthru
      _
    %p1467 = scmp.le.s32.totalorder 2, %s11
    // Predicated region
    $region56: #{tpu_custom_call.1} parent=5 // pred_check
      %p1468 = pneg %p1467
    $region57: #{tpu_custom_call.1} parent=5 // pred_check_branch
      %1470 = sbr.rel (%p1468) target = $region59
    $region58: #{tpu_custom_call.1} parent=5 // pred_region
      %s1471 = ssub.s32 %s11, 2
      // Predicated region
      $region60: #{tpu_custom_call.1} parent=58 // pred_check
        %p1472 = pneg %p143
      $region61: #{tpu_custom_call.1} parent=58 // pred_check_branch
        %1474 = sbr.rel (%p1472) target = $region63
      $region62: #{tpu_custom_call.1} parent=58 // pred_region
        %s1475 = smul.u32 16, %s23
        %p1476 = scmp.lt.s32.totalorder %s22, 1
        %s1477 = scalar_select %p1476, %s22, 1
        %p1478 = scmp.lt.s32.totalorder %s1475, 31
        %s1479 = scalar_select %p1478, %s1475, 31
        %s1480 = smul.addr %s1477, 32
        %s1481 = sadd.s32 %s1479, %s1480
        %s1482 = smul.addr %s1481, 8
        %s1483 = scalar_lea.vmem %s5, %s1482
      $region63: #{tpu_custom_call.1} parent=58 // pred_fallthru
        _
    $region59: #{tpu_custom_call.1} parent=5 // pred_fallthru
      _
  $region6: #{tpu_custom_call.1} parent=0 // loop_footer
    %s15 = sadd.s32 1, %s11
  $region7: #{tpu_custom_call.1} parent=0 // loop_footer_branch
    %10 = sbr.rel target = $region3
  $region8: #{tpu_custom_call.1} parent=0 // loop_exit
    _
  %1484 = vsyncmov [#allocation4]
  %s1485 = vpop.sfrf %1484
  %p1486 = scmp.eq.s32.totalorder %s1485, 0
  %p1487 = pneg %p1486
  %1489 = shalt.err (%p1487)
  %s1490 = scalar_lea.sflag [#allocation4], 1
  %1491 = vsyncmov %s1490
  %s1492 = vpop.sfrf %1491
  %p1493 = scmp.eq.s32.totalorder %s1492, 0
  %p1494 = pneg %p1493
  %1496 = shalt.err (%p1494)

</llo_original>
